<compile_context>
chip_gen: v6e
topology: v6e:2x2x1
jax: 0.10.0
libtpu: 0.0.40
codegen_flags: <defaults>
</compile_context>

<pallas_src>
import functools

import jax
import jax.numpy as jnp
from jax.experimental import pallas as pl
from jax.experimental.pallas import tpu as pltpu


# ----------------------------------------------------------------------------
# Fused kernel: RGCN1 -> BN+ReLU -> RGCN2 -> global mean pool (VMEM-resident).
# ----------------------------------------------------------------------------
def _m_encoder_kernel(
    x_ref,        # [Np, Fp]         bf16  zero-padded node features
    adj_ref,      # [R*Np, Np]       bf16  row-stacked mean-normalized adjacency
    wstack1_ref,  # [(R+1)*Fp, Fp]   bf16  row-stacked [W_root; W_1..W_R] (padded)
    bias1_ref,    # [1, Fp]          f32
    gamma_ref,    # [1, Fp]          f32
    beta_ref,     # [1, Fp]          f32
    wstack2_ref,  # [(R+1)*Fp, Fp]   bf16
    bias2_ref,    # [1, Fp]          f32
    pool_ref,     # [G, Np]          bf16  mean-pool matrix (zero cols on padding)
    mask_ref,     # [Np, 1]          f32   1.0 for real nodes, 0.0 for padded rows
    o_ref,        # [G, Fp]          f32
    *,
    num_rel,
    n_pad,
    inv_n,
    eps,
):
    bf16 = jnp.bfloat16
    f32 = jnp.float32

    x = x_ref[...]
    adj = adj_ref[...]
    mask = mask_ref[...]

    def rgcn(feat_bf16, wstack_ref, bias_ref):
        # (a) all R relation message passes in ONE MXU call: [R*Np,Np] @ [Np,Fp]
        msgs = jnp.dot(adj, feat_bf16, preferred_element_type=f32).astype(bf16)
        # (b) lane-concat [x | msg_0 | ... | msg_{R-1}]  ->  [Np, (R+1)*Fp]
        parts = [feat_bf16] + [
            msgs[r * n_pad:(r + 1) * n_pad, :] for r in range(num_rel)
        ]
        cat = jnp.concatenate(parts, axis=-1)
        # one large-K matmul against row-stacked [W_root; W_1; ...; W_R]
        return jnp.dot(cat, wstack_ref[...],
                       preferred_element_type=f32) + bias_ref[...]

    # ---- RGCN layer 1 ----
    h = rgcn(x, wstack1_ref, bias1_ref)

    # ---- BatchNorm1d (batch stats over the REAL nodes only) + ReLU ----
    # two-pass, mean-centered variance in f32 (avoids E[x^2]-mean^2 cancellation)
    mean = jnp.sum(h * mask, axis=0, keepdims=True) * inv_n
    centered = (h - mean) * mask
    var = jnp.sum(centered * centered, axis=0, keepdims=True) * inv_n
    hn = centered * jax.lax.rsqrt(var + eps) * gamma_ref[...] + beta_ref[...]
    hb = jnp.maximum(hn, 0.0).astype(bf16)

    # ---- RGCN layer 2 ----
    h2 = rgcn(hb, wstack2_ref, bias2_ref)

    # ---- global mean pool: P @ H2 (bf16 operands, f32 accumulate) ----
    o_ref[...] = jnp.dot(pool_ref[...], h2.astype(bf16),
                         preferred_element_type=f32).astype(o_ref.dtype)


# ----------------------------------------------------------------------------
# Wrapper: pad to lane/sublane-dense shapes, stack weights/adjacency, call once.
# ----------------------------------------------------------------------------
def _pad2(a, rows, cols, val=0.0):
    return jnp.pad(a, ((0, rows - a.shape[0]), (0, cols - a.shape[1])),
                   constant_values=val)


def m_encoder_forward(x, adj_norm, pool_mat, params, eps=1e-5):
    """x: [N, Fin] f32, adj_norm: [R, N, N] f32, pool_mat: [G, N] f32."""
    (w_rel1, w_root1, bias1), (gamma, beta), (w_rel2, w_root2, bias2) = params
    R, N, _ = adj_norm.shape
    Fin = x.shape[1]
    Fout = w_root1.shape[1]
    G = pool_mat.shape[0]
    bf16, f32 = jnp.bfloat16, jnp.float32

    LANE, SUBLANE = 128, 16                       # lane width / bf16 sublane pack
    Fp = ((max(Fin, Fout) + LANE - 1) // LANE) * LANE
    Np = ((N + SUBLANE - 1) // SUBLANE) * SUBLANE

    # padded, lane-dense operands
    xp = _pad2(x, Np, Fp).astype(bf16)
    adjp = jnp.pad(adj_norm, ((0, 0), (0, Np - N), (0, Np - N))
                   ).reshape(R * Np, Np).astype(bf16)

    def stack_w(w_root, w_rel):
        blocks = [_pad2(w_root, Fp, Fp)] + [_pad2(w_rel[r], Fp, Fp)
                                            for r in range(R)]
        return jnp.concatenate(blocks, axis=0).astype(bf16)   # [(R+1)*Fp, Fp]

    ws1 = stack_w(w_root1, w_rel1)
    ws2 = stack_w(w_root2, w_rel2)
    b1 = _pad2(bias1.reshape(1, -1), 1, Fp).astype(f32)
    b2 = _pad2(bias2.reshape(1, -1), 1, Fp).astype(f32)
    g = _pad2(gamma.reshape(1, -1), 1, Fp, val=1.0).astype(f32)
    bt = _pad2(beta.reshape(1, -1), 1, Fp).astype(f32)
    poolp = _pad2(pool_mat, G, Np).astype(bf16)
    maskp = (jnp.arange(Np) < N).astype(f32).reshape(Np, 1)

    kernel = functools.partial(_m_encoder_kernel, num_rel=R, n_pad=Np,
                               inv_n=1.0 / N, eps=eps)

    operands = (xp, adjp, ws1, b1, g, bt, ws2, b2, poolp, maskp)
    total_bytes = sum(int(a.size) * a.dtype.itemsize for a in operands) + G * Fp * 4
    vmem_limit = int(min(64 * 1024 * 1024, max(16 * 1024 * 1024, 4 * total_bytes)))

    vmem = pl.BlockSpec(memory_space=pltpu.MemorySpace.VMEM)

    # TODO(synk): for production-scale graphs, node-tile adjacency/activations with
    # a grid over node tiles (BN stats reduced across tiles under pl.when), mark the
    # node-tile axis "parallel" for v7x's 2 TensorCores, and stream adj via
    # Buffered BlockSpecs instead of keeping the full [R*N, N] block VMEM-resident.
    out = pl.pallas_call(
        kernel,
        out_shape=jax.ShapeDtypeStruct((G, Fp), f32),
        in_specs=[vmem] * len(operands),
        out_specs=vmem,
        compiler_params=pltpu.CompilerParams(vmem_limit_bytes=vmem_limit),
    )(*operands)
    return out[:, :Fout]


# ----------------------------------------------------------------------------
# Plain-JAX reference (f32) for correctness checking.
# ----------------------------------------------------------------------------
def m_encoder_reference(x, adj_norm, pool_mat, params, eps=1e-5):
    (w_rel1, w_root1, bias1), (gamma, beta), (w_rel2, w_root2, bias2) = params

    def rgcn(feat, w_rel, w_root, bias):
        h = feat @ w_root + bias
        for r in range(adj_norm.shape[0]):
            h = h + (adj_norm[r] @ feat) @ w_rel[r]
        return h

    h = rgcn(x, w_rel1, w_root1, bias1)
    mean = h.mean(axis=0, keepdims=True)
    var = ((h - mean) ** 2).mean(axis=0, keepdims=True)      # biased, like torch BN
    h = (h - mean) / jnp.sqrt(var + eps) * gamma + beta
    h = jnp.maximum(h, 0.0)
    h2 = rgcn(h, w_rel2, w_root2, bias2)
    return pool_mat @ h2


# ----------------------------------------------------------------------------
# Parameter / graph construction (deterministic, plain-JAX glue).
# ----------------------------------------------------------------------------
def make_rgcn_params(key, fin, fout, num_relations, num_bases, after_relu):
    kb, kc, kr, _ = jax.random.split(key, 4)
    scale = (2.0 / fin) ** 0.5 if after_relu else (1.0 / fin) ** 0.5
    basis = jax.random.normal(kb, (num_bases, fin, fout), jnp.float32) * scale
    comp = jax.random.normal(kc, (num_relations, num_bases), jnp.float32) * (
        1.0 / num_bases ** 0.5)
    w_root = jax.random.normal(kr, (fin, fout), jnp.float32) * scale
    bias = jnp.zeros((fout,), jnp.float32)
    # basis decomposition: W_r = sum_b comp[r, b] * V_b  (small; plain JAX glue)
    w_rel = jnp.einsum("rb,bio->rio", comp, basis)
    return w_rel, w_root, bias


def build_adjacency(edge_index_per_rel, num_nodes):
    """Dense mean-normalized adjacency: A[r, dst, src] = 1 / in_deg_r(dst)."""
    adjs = []
    for src, dst in edge_index_per_rel:
        a = jnp.zeros((num_nodes, num_nodes), jnp.float32)
        a = a.at[dst, src].add(1.0)
        deg = jnp.maximum(a.sum(axis=1, keepdims=True), 1.0)
        adjs.append(a / deg)
    return jnp.stack(adjs, axis=0)


def build_pool_matrix(batch_vec, num_graphs, num_nodes):
    onehot = (batch_vec[None, :] == jnp.arange(num_graphs)[:, None]).astype(jnp.float32)
    counts = jnp.maximum(onehot.sum(axis=1, keepdims=True), 1.0)
    return onehot / counts


if __name__ == "__main__":
    # Small synthetic sizes consistent with the module's forward:
    num_drugs = 2
    atoms_per_drug = 16
    N = num_drugs * atoms_per_drug          # 32 atoms total
    num_feat_per_atom = 16                  # in_channels of rgcn_mol1
    out_channels = 32
    num_bonds = 4                           # 4 bond relations
    num_bases = 32

    key = jax.random.PRNGKey(0)
    kx, ke, kp1, kp2 = jax.random.split(key, 4)

    # node (atom) features
    x = jax.random.normal(kx, (N, num_feat_per_atom), jnp.float32)

    # per-relation edge lists, kept within each molecule
    edge_index_per_rel = []
    ekeys = jax.random.split(ke, num_bonds)
    edges_per_rel = 24
    for r in range(num_bonds):
        km, ks, kd = jax.random.split(ekeys[r], 3)
        mol = jax.random.randint(km, (edges_per_rel,), 0, num_drugs)
        src = jax.random.randint(ks, (edges_per_rel,), 0, atoms_per_drug) + mol * atoms_per_drug
        dst = jax.random.randint(kd, (edges_per_rel,), 0, atoms_per_drug) + mol * atoms_per_drug
        edge_index_per_rel.append((src, dst))

    adj_norm = build_adjacency(edge_index_per_rel, N)

    batch_vec = jnp.repeat(jnp.arange(num_drugs), atoms_per_drug)
    pool_mat = build_pool_matrix(batch_vec, num_drugs, N)

    # rgcn_mol1: in=num_feat_per_atom -> out_channels, after_relu=False
    p1 = make_rgcn_params(kp1, num_feat_per_atom, out_channels, num_bonds,
                          num_bases, after_relu=False)
    # BatchNorm1d(out_channels), affine params
    gamma = jnp.ones((out_channels,), jnp.float32)
    beta = jnp.zeros((out_channels,), jnp.float32)
    # rgcn_mol2: in=out_channels -> out_channels, after_relu=True
    p2 = make_rgcn_params(kp2, out_channels, out_channels, num_bonds,
                          num_bases, after_relu=True)

    params = (p1, (gamma, beta), p2)

    out = m_encoder_forward(x, adj_norm, pool_mat, params)
    out = jax.block_until_ready(out)
    ref = m_encoder_reference(x, adj_norm, pool_mat, params)

    assert out.shape == (num_drugs, out_channels)
    assert bool(jnp.all(jnp.isfinite(out)))
    assert bool(jnp.allclose(out, ref, rtol=1e-1, atol=1e-1)), (
        "max abs diff = %f" % float(jnp.max(jnp.abs(out - ref))))
    print("KERNEL_OK")
</pallas_src>

<mosaic_0001>
module attributes {stable_mosaic.version = 11 : i64} {
  func.func @_m_encoder_kernel(%arg0: memref<32x128xbf16, #tpu.memory_space<vmem>>, %arg1: memref<128x32xbf16, #tpu.memory_space<vmem>>, %arg2: memref<640x128xbf16, #tpu.memory_space<vmem>>, %arg3: memref<1x128xf32, #tpu.memory_space<vmem>>, %arg4: memref<1x128xf32, #tpu.memory_space<vmem>>, %arg5: memref<1x128xf32, #tpu.memory_space<vmem>>, %arg6: memref<640x128xbf16, #tpu.memory_space<vmem>>, %arg7: memref<1x128xf32, #tpu.memory_space<vmem>>, %arg8: memref<2x32xbf16, #tpu.memory_space<vmem>>, %arg9: memref<32x1xf32, #tpu.memory_space<vmem>>, %arg10: memref<2x128xf32, #tpu.memory_space<vmem>>) attributes {dimension_semantics = [], scalar_prefetch = 0 : i64, scratch_operands = 0 : i64, tpu.core_type = #tpu.core_type<tc>} {
    %c0 = arith.constant 0 : index
    %c0_0 = arith.constant 0 : index
    %0 = vector.load %arg0[%c0, %c0_0] : memref<32x128xbf16, #tpu.memory_space<vmem>>, vector<32x128xbf16>
    %c0_1 = arith.constant 0 : index
    %c0_2 = arith.constant 0 : index
    %1 = vector.load %arg1[%c0_1, %c0_2] : memref<128x32xbf16, #tpu.memory_space<vmem>>, vector<128x32xbf16>
    %c0_3 = arith.constant 0 : index
    %c0_4 = arith.constant 0 : index
    %2 = vector.load %arg9[%c0_3, %c0_4] : memref<32x1xf32, #tpu.memory_space<vmem>>, vector<32x1xf32>
    %cst = arith.constant dense<0.000000e+00> : vector<128x128xf32>
    %3 = tpu.matmul %1, %0, %cst {dimension_numbers = #tpu.dot_dimension_numbers<[1], [0], [0], [1], [0, 0, 1, 1], [], []>} : vector<128x32xbf16>, vector<32x128xbf16>, vector<128x128xf32> -> vector<128x128xf32>
    %4 = arith.truncf %3 : vector<128x128xf32> to vector<128x128xbf16>
    %5 = vector.extract_strided_slice %4 {offsets = [0, 0], sizes = [32, 128], strides = [1, 1]} : vector<128x128xbf16> to vector<32x128xbf16>
    %6 = vector.extract_strided_slice %4 {offsets = [32, 0], sizes = [32, 128], strides = [1, 1]} : vector<128x128xbf16> to vector<32x128xbf16>
    %7 = vector.extract_strided_slice %4 {offsets = [64, 0], sizes = [32, 128], strides = [1, 1]} : vector<128x128xbf16> to vector<32x128xbf16>
    %8 = vector.extract_strided_slice %4 {offsets = [96, 0], sizes = [32, 128], strides = [1, 1]} : vector<128x128xbf16> to vector<32x128xbf16>
    %9 = tpu.concatenate %0, %5, %6, %7, %8 in 1 : vector<32x128xbf16>, vector<32x128xbf16>, vector<32x128xbf16>, vector<32x128xbf16>, vector<32x128xbf16> -> vector<32x640xbf16>
    %c0_5 = arith.constant 0 : index
    %c0_6 = arith.constant 0 : index
    %10 = vector.load %arg2[%c0_5, %c0_6] : memref<640x128xbf16, #tpu.memory_space<vmem>>, vector<640x128xbf16>
    %cst_7 = arith.constant dense<0.000000e+00> : vector<32x128xf32>
    %11 = tpu.matmul %9, %10, %cst_7 {dimension_numbers = #tpu.dot_dimension_numbers<[1], [0], [0], [1], [0, 0, 1, 1], [], []>} : vector<32x640xbf16>, vector<640x128xbf16>, vector<32x128xf32> -> vector<32x128xf32>
    %c0_8 = arith.constant 0 : index
    %c0_9 = arith.constant 0 : index
    %12 = vector.load %arg3[%c0_8, %c0_9] : memref<1x128xf32, #tpu.memory_space<vmem>>, vector<1x128xf32>
    %13 = vector.broadcast %12 : vector<1x128xf32> to vector<32x128xf32>
    %14 = arith.addf %11, %13 : vector<32x128xf32>
    %15 = vector.broadcast %2 : vector<32x1xf32> to vector<32x128xf32>
    %16 = arith.mulf %14, %15 : vector<32x128xf32>
    %cst_10 = arith.constant dense<0.000000e+00> : vector<128xf32>
    %17 = vector.multi_reduction <add>, %16, %cst_10 [0] : vector<32x128xf32> to vector<128xf32>
    %18 = vector.shape_cast %17 : vector<128xf32> to vector<1x128xf32>
    %cst_11 = arith.constant 3.125000e-02 : f32
    %19 = vector.broadcast %cst_11 : f32 to vector<1x128xf32>
    %20 = arith.mulf %18, %19 : vector<1x128xf32>
    %21 = vector.broadcast %20 : vector<1x128xf32> to vector<32x128xf32>
    %22 = arith.subf %14, %21 : vector<32x128xf32>
    %23 = vector.broadcast %2 : vector<32x1xf32> to vector<32x128xf32>
    %24 = arith.mulf %22, %23 : vector<32x128xf32>
    %25 = arith.mulf %24, %24 : vector<32x128xf32>
    %cst_12 = arith.constant dense<0.000000e+00> : vector<128xf32>
    %26 = vector.multi_reduction <add>, %25, %cst_12 [0] : vector<32x128xf32> to vector<128xf32>
    %27 = vector.shape_cast %26 : vector<128xf32> to vector<1x128xf32>
    %cst_13 = arith.constant 3.125000e-02 : f32
    %28 = vector.broadcast %cst_13 : f32 to vector<1x128xf32>
    %29 = arith.mulf %27, %28 : vector<1x128xf32>
    %cst_14 = arith.constant 9.99999974E-6 : f32
    %30 = vector.broadcast %cst_14 : f32 to vector<1x128xf32>
    %31 = arith.addf %29, %30 : vector<1x128xf32>
    %32 = math.rsqrt %31 : vector<1x128xf32>
    %33 = vector.broadcast %32 : vector<1x128xf32> to vector<32x128xf32>
    %34 = arith.mulf %24, %33 : vector<32x128xf32>
    %c0_15 = arith.constant 0 : index
    %c0_16 = arith.constant 0 : index
    %35 = vector.load %arg4[%c0_15, %c0_16] : memref<1x128xf32, #tpu.memory_space<vmem>>, vector<1x128xf32>
    %36 = vector.broadcast %35 : vector<1x128xf32> to vector<32x128xf32>
    %37 = arith.mulf %34, %36 : vector<32x128xf32>
    %c0_17 = arith.constant 0 : index
    %c0_18 = arith.constant 0 : index
    %38 = vector.load %arg5[%c0_17, %c0_18] : memref<1x128xf32, #tpu.memory_space<vmem>>, vector<1x128xf32>
    %39 = vector.broadcast %38 : vector<1x128xf32> to vector<32x128xf32>
    %40 = arith.addf %37, %39 : vector<32x128xf32>
    %cst_19 = arith.constant 0.000000e+00 : f32
    %41 = vector.broadcast %cst_19 : f32 to vector<32x128xf32>
    %42 = arith.maximumf %40, %41 : vector<32x128xf32>
    %43 = arith.truncf %42 : vector<32x128xf32> to vector<32x128xbf16>
    %cst_20 = arith.constant dense<0.000000e+00> : vector<128x128xf32>
    %44 = tpu.matmul %1, %43, %cst_20 {dimension_numbers = #tpu.dot_dimension_numbers<[1], [0], [0], [1], [0, 0, 1, 1], [], []>} : vector<128x32xbf16>, vector<32x128xbf16>, vector<128x128xf32> -> vector<128x128xf32>
    %45 = arith.truncf %44 : vector<128x128xf32> to vector<128x128xbf16>
    %46 = vector.extract_strided_slice %45 {offsets = [0, 0], sizes = [32, 128], strides = [1, 1]} : vector<128x128xbf16> to vector<32x128xbf16>
    %47 = vector.extract_strided_slice %45 {offsets = [32, 0], sizes = [32, 128], strides = [1, 1]} : vector<128x128xbf16> to vector<32x128xbf16>
    %48 = vector.extract_strided_slice %45 {offsets = [64, 0], sizes = [32, 128], strides = [1, 1]} : vector<128x128xbf16> to vector<32x128xbf16>
    %49 = vector.extract_strided_slice %45 {offsets = [96, 0], sizes = [32, 128], strides = [1, 1]} : vector<128x128xbf16> to vector<32x128xbf16>
    %50 = tpu.concatenate %43, %46, %47, %48, %49 in 1 : vector<32x128xbf16>, vector<32x128xbf16>, vector<32x128xbf16>, vector<32x128xbf16>, vector<32x128xbf16> -> vector<32x640xbf16>
    %c0_21 = arith.constant 0 : index
    %c0_22 = arith.constant 0 : index
    %51 = vector.load %arg6[%c0_21, %c0_22] : memref<640x128xbf16, #tpu.memory_space<vmem>>, vector<640x128xbf16>
    %cst_23 = arith.constant dense<0.000000e+00> : vector<32x128xf32>
    %52 = tpu.matmul %50, %51, %cst_23 {dimension_numbers = #tpu.dot_dimension_numbers<[1], [0], [0], [1], [0, 0, 1, 1], [], []>} : vector<32x640xbf16>, vector<640x128xbf16>, vector<32x128xf32> -> vector<32x128xf32>
    %c0_24 = arith.constant 0 : index
    %c0_25 = arith.constant 0 : index
    %53 = vector.load %arg7[%c0_24, %c0_25] : memref<1x128xf32, #tpu.memory_space<vmem>>, vector<1x128xf32>
    %54 = vector.broadcast %53 : vector<1x128xf32> to vector<32x128xf32>
    %55 = arith.addf %52, %54 : vector<32x128xf32>
    %c0_26 = arith.constant 0 : index
    %c0_27 = arith.constant 0 : index
    %56 = vector.load %arg8[%c0_26, %c0_27] : memref<2x32xbf16, #tpu.memory_space<vmem>>, vector<2x32xbf16>
    %57 = arith.truncf %55 : vector<32x128xf32> to vector<32x128xbf16>
    %cst_28 = arith.constant dense<0.000000e+00> : vector<2x128xf32>
    %58 = tpu.matmul %56, %57, %cst_28 {dimension_numbers = #tpu.dot_dimension_numbers<[1], [0], [0], [1], [0, 0, 1, 1], [], []>} : vector<2x32xbf16>, vector<32x128xbf16>, vector<2x128xf32> -> vector<2x128xf32>
    %c0_29 = arith.constant 0 : index
    %c0_30 = arith.constant 0 : index
    %59 = vector.load %arg10[%c0_29, %c0_30] : memref<2x128xf32, #tpu.memory_space<vmem>>, vector<2x128xf32>
    tpu.vector_store %arg10[%c0_29, %c0_30], %58 {strides = array<i32>} : memref<2x128xf32, #tpu.memory_space<vmem>>, vector<2x128xf32>,
    return
  }
}

</mosaic_0001>

<llo_original>
// kernel: tpu_custom_call.1
$region0: #{tpu_custom_call.1}
  #allocation0 [shape = 'u32[]', space=smem, size = 0x4, offset = 0x4, fixed_abs, tag = 'smem constant byte address 0x4 - core index']
  #allocation1 [shape = 'u32[144,128]{1,0:T(1,128)}', space=vmem, size = 0x12000, scoped, tag = 'internal scratch']
  %s0 = inlined_call_operand.vmem [shape: bf16[32,128], index: 0, kind: input, shape index: {}]
  %s1 = inlined_call_operand.vmem [shape: bf16[128,32], index: 1, kind: input, shape index: {}]
  %s2 = inlined_call_operand.hbm [shape: bf16[640,128], index: 2, kind: input, shape index: {}]
  %s3 = inlined_call_operand.vmem [shape: f32[1,128], index: 3, kind: input, shape index: {}]
  %s4 = inlined_call_operand.vmem [shape: f32[1,128], index: 4, kind: input, shape index: {}]
  %s5 = inlined_call_operand.vmem [shape: f32[1,128], index: 5, kind: input, shape index: {}]
  %s6 = inlined_call_operand.hbm [shape: bf16[640,128], index: 6, kind: input, shape index: {}]
  %s7 = inlined_call_operand.vmem [shape: f32[1,128], index: 7, kind: input, shape index: {}]
  %s8 = inlined_call_operand.vmem [shape: bf16[2,32], index: 8, kind: input, shape index: {}]
  %s9 = inlined_call_operand.vmem [shape: f32[32,1], index: 9, kind: input, shape index: {}]
  %s10 = inlined_call_operand.hbm [shape: f32[2,128], index: 10, kind: output, shape index: {}]
  %s11 = sld [smem:[#allocation0]]
  $region58: #{tpu_custom_call.1} parent=0
    _
  %s13 = ssub.s32 1, %s11
  %s14 = scalar_select 0, %s13, %s11
  $region1: #{tpu_custom_call.1} parent=0
    #allocation2 [shape = 'u8[163840]{0}', space=vmem, size = 0x28000, scoped, tag = 'input window, operand 2, single buffered']
    #allocation3 [shape = 's32[1]{0}', space=sflag, size = 0x4, scoped, tag = 'scoped memory for tpu_custom_call.1']
    #allocation4 [shape = 's32[1]{0}', space=sflag, size = 0x4, scoped, tag = 'scoped memory for tpu_custom_call.1']
    #allocation5 [shape = 'u8[163840]{0}', space=vmem, size = 0x28000, scoped, tag = 'input window, operand 6, single buffered']
    #allocation6 [shape = 's32[1]{0}', space=sflag, size = 0x4, scoped, tag = 'scoped memory for tpu_custom_call.1']
    #allocation7 [shape = 'u8[1024]{0}', space=vmem, size = 0x400, scoped, tag = 'output window, operand 0, single buffered']
    %15 = vsyncpa [#allocation3], 0
    %16 = vsyncpa [#allocation6], 0
    %17 = vsyncpa [#allocation4], 0
    // Predicated region
    $region2: #{tpu_custom_call.1} parent=1 // pred_check
      _
    $region3: #{tpu_custom_call.1} parent=1 // pred_check_branch
      %19 = sbr.rel (0) target = $region5
    $region4: #{tpu_custom_call.1} parent=1 // pred_region
      _
    $region5: #{tpu_custom_call.1} parent=1 // pred_fallthru
      _
    // Predicated region
    $region6: #{tpu_custom_call.1} parent=1 // pred_check
      _
    $region7: #{tpu_custom_call.1} parent=1 // pred_check_branch
      %21 = sbr.rel (0) target = $region9
    $region8: #{tpu_custom_call.1} parent=1 // pred_region
      _
    $region9: #{tpu_custom_call.1} parent=1 // pred_fallthru
      _
    // Predicated region
    $region10: #{tpu_custom_call.1} parent=1 // pred_check
      _
    $region11: #{tpu_custom_call.1} parent=1 // pred_check_branch
      %23 = sbr.rel (0) target = $region13
    $region12: #{tpu_custom_call.1} parent=1 // pred_region
      %s25 = ssub.s32 5120, 5120
      %26 = vsyncadd [#allocation3], %s25
      %s27 = sshll.u32 [#allocation2], 4
      %s28 = int_to_ptr.vmem [resolvable:$true] %s27
      %33 = dma.hbm_to_vmem [thread:$0]  %s2, 5120, %s28, [#allocation3], 64, 64, 4
    $region13: #{tpu_custom_call.1} parent=1 // pred_fallthru
      _
    // Predicated region
    $region14: #{tpu_custom_call.1} parent=1 // pred_check
      _
    $region15: #{tpu_custom_call.1} parent=1 // pred_check_branch
      %35 = sbr.rel (0) target = $region17
    $region16: #{tpu_custom_call.1} parent=1 // pred_region
      _
    $region17: #{tpu_custom_call.1} parent=1 // pred_fallthru
      _
    // Predicated region
    $region18: #{tpu_custom_call.1} parent=1 // pred_check
      _
    $region19: #{tpu_custom_call.1} parent=1 // pred_check_branch
      %37 = sbr.rel (0) target = $region21
    $region20: #{tpu_custom_call.1} parent=1 // pred_region
      _
    $region21: #{tpu_custom_call.1} parent=1 // pred_fallthru
      _
    // Predicated region
    $region22: #{tpu_custom_call.1} parent=1 // pred_check
      _
    $region23: #{tpu_custom_call.1} parent=1 // pred_check_branch
      %39 = sbr.rel (0) target = $region25
    $region24: #{tpu_custom_call.1} parent=1 // pred_region
      _
    $region25: #{tpu_custom_call.1} parent=1 // pred_fallthru
      _
    // Predicated region
    $region26: #{tpu_custom_call.1} parent=1 // pred_check
      _
    $region27: #{tpu_custom_call.1} parent=1 // pred_check_branch
      %41 = sbr.rel (0) target = $region29
    $region28: #{tpu_custom_call.1} parent=1 // pred_region
      %s43 = ssub.s32 5120, 5120
      %44 = vsyncadd [#allocation6], %s43
      %s45 = sshll.u32 [#allocation5], 4
      %s46 = int_to_ptr.vmem [resolvable:$true] %s45
      %51 = dma.hbm_to_vmem [thread:$0]  %s6, 5120, %s46, [#allocation6], 64, 64, 4
    $region29: #{tpu_custom_call.1} parent=1 // pred_fallthru
      _
    // Predicated region
    $region30: #{tpu_custom_call.1} parent=1 // pred_check
      _
    $region31: #{tpu_custom_call.1} parent=1 // pred_check_branch
      %53 = sbr.rel (0) target = $region33
    $region32: #{tpu_custom_call.1} parent=1 // pred_region
      _
    $region33: #{tpu_custom_call.1} parent=1 // pred_fallthru
      _
    // Predicated region
    $region34: #{tpu_custom_call.1} parent=1 // pred_check
      _
    $region35: #{tpu_custom_call.1} parent=1 // pred_check_branch
      %55 = sbr.rel (0) target = $region37
    $region36: #{tpu_custom_call.1} parent=1 // pred_region
      _
    $region37: #{tpu_custom_call.1} parent=1 // pred_fallthru
      _
    // Predicated region
    $region38: #{tpu_custom_call.1} parent=1 // pred_check
      _
    $region39: #{tpu_custom_call.1} parent=1 // pred_check_branch
      %57 = sbr.rel (0) target = $region41
    $region40: #{tpu_custom_call.1} parent=1 // pred_region
      _
    $region41: #{tpu_custom_call.1} parent=1 // pred_fallthru
      _
    // Predicated region
    $region42: #{tpu_custom_call.1} parent=1 // pred_check
      _
    $region43: #{tpu_custom_call.1} parent=1 // pred_check_branch
      %59 = sbr.rel (0) target = $region45
    $region44: #{tpu_custom_call.1} parent=1 // pred_region
      %60 = dma.done [#allocation3], 5120
    $region45: #{tpu_custom_call.1} parent=1 // pred_fallthru
      _
    // Predicated region
    $region46: #{tpu_custom_call.1} parent=1 // pred_check
      _
    $region47: #{tpu_custom_call.1} parent=1 // pred_check_branch
      %62 = sbr.rel (0) target = $region49
    $region48: #{tpu_custom_call.1} parent=1 // pred_region
      %63 = dma.done [#allocation6], 5120
    $region49: #{tpu_custom_call.1} parent=1 // pred_fallthru
      _
    %v65 = vld [vmem:[%s0] sm:$0xf]
    %v66 = vld [vmem:[%s0 + $0x4] sm:$0xf]
    %v67 = vld [vmem:[%s0 + $0x8] sm:$0xf]
    %v68 = vld [vmem:[%s0 + $0xc] sm:$0xf]
    %v69 = vld [vmem:[%s1] sm:$0xf]
    %v70 = vld [vmem:[%s1 + $0x4] sm:$0xf]
    %v71 = vld [vmem:[%s1 + $0x8] sm:$0xf]
    %v72 = vld [vmem:[%s1 + $0xc] sm:$0xf]
    %v73 = vld [vmem:[%s1 + $0x10] sm:$0xf]
    %v74 = vld [vmem:[%s1 + $0x14] sm:$0xf]
    %v75 = vld [vmem:[%s1 + $0x18] sm:$0xf]
    %v76 = vld [vmem:[%s1 + $0x1c] sm:$0xf]
    %v77 = vld [vmem:[%s1 + $0x20] sm:$0xf]
    %v78 = vld [vmem:[%s1 + $0x24] sm:$0xf]
    %v79 = vld [vmem:[%s1 + $0x28] sm:$0xf]
    %v80 = vld [vmem:[%s1 + $0x2c] sm:$0xf]
    %v81 = vld [vmem:[%s1 + $0x30] sm:$0xf]
    %v82 = vld [vmem:[%s1 + $0x34] sm:$0xf]
    %v83 = vld [vmem:[%s1 + $0x38] sm:$0xf]
    %v84 = vld [vmem:[%s1 + $0x3c] sm:$0xf]
    %v85 = vld [vmem:[%s9] sm:$0xff]
    %v86 = vld [vmem:[%s9 + $0x8] sm:$0xff]
    %v87 = vld [vmem:[%s9 + $0x10] sm:$0xff]
    %v88 = vld [vmem:[%s9 + $0x18] sm:$0xff]
    %v105 = vunpack.c.l.b16 %v69
    %v106 = vunpack.c.l.b16 %v70
    %v107 = vunpack.c.l.b16 %v71
    %v108 = vunpack.c.l.b16 %v72
    %v109 = vunpack.c.l.b16 %v73
    %v110 = vunpack.c.l.b16 %v74
    %v111 = vunpack.c.l.b16 %v75
    %v112 = vunpack.c.l.b16 %v76
    %v113 = vunpack.c.l.b16 %v77
    %v114 = vunpack.c.l.b16 %v78
    %v115 = vunpack.c.l.b16 %v79
    %v116 = vunpack.c.l.b16 %v80
    %v117 = vunpack.c.l.b16 %v81
    %v118 = vunpack.c.l.b16 %v82
    %v119 = vunpack.c.l.b16 %v83
    %v120 = vunpack.c.l.b16 %v84
    %v121 = vpack.c.b16 %v106, %v105
    %v122 = vpack.c.b16 %v108, %v107
    %v123 = vpack.c.b16 %v110, %v109
    %v124 = vpack.c.b16 %v112, %v111
    %v125 = vpack.c.b16 %v114, %v113
    %v126 = vpack.c.b16 %v116, %v115
    %v127 = vpack.c.b16 %v118, %v117
    %v128 = vpack.c.b16 %v120, %v119
    %v133 = vunpack.c.l.b16 %v65
    %v134 = vunpack.c.l.b16 %v66
    %v135 = vunpack.c.l.b16 %v67
    %v136 = vunpack.c.l.b16 %v68
    %v137 = vpack.c.b16 %v134, %v133
    %v138 = vpack.c.b16 %v136, %v135
    %vm141 = vcmask 261120
    %v143 = vsel %vm141, %v121, 0
    %v146 = vsel %vm141, %v122, 0
    %v149 = vsel %vm141, %v123, 0
    %v152 = vsel %vm141, %v124, 0
    %v155 = vsel %vm141, %v125, 0
    %v158 = vsel %vm141, %v126, 0
    %v161 = vsel %vm141, %v127, 0
    %v164 = vsel %vm141, %v128, 0
    %166 = vmatprep.subr.bf16.mxu0 0
    %167 = vmatpush1.bf16.msra.mxu0 0
    %168 = vmatprep.subr.bf16.mxu0 0
    %169 = vmatpush1.bf16.msra.mxu0 0
    %170 = vmatprep.subr.bf16.mxu0 0
    %171 = vmatpush1.bf16.msra.mxu0 0
    %172 = vmatprep.subr.bf16.mxu0 0
    %173 = vmatpush1.bf16.msra.mxu0 0
    %174 = vmatprep.subr.bf16.mxu0 0
    %175 = vmatpush1.bf16.msra.mxu0 0
    %176 = vmatprep.subr.bf16.mxu0 0
    %177 = vmatpush1.bf16.msra.mxu0 0
    %178 = vmatprep.subr.bf16.mxu0 0
    %179 = vmatpush1.bf16.msra.mxu0 %v138
    %180 = vmatprep.subr.bf16.mxu0 0
    %181 = vmatpush1.bf16.msra.mxu0 %v137
    %182 = vmatprep.subr.bf16.mxu0 0
    %183 = vmatpush2.bf16.msra.mxu0 0
    %184 = vmatprep.subr.bf16.mxu0 0
    %185 = vmatpush2.bf16.msra.mxu0 0
    %186 = vmatprep.subr.bf16.mxu0 0
    %187 = vmatpush2.bf16.msra.mxu0 0
    %188 = vmatprep.subr.bf16.mxu0 0
    %189 = vmatpush2.bf16.msra.mxu0 0
    %190 = vmatprep.subr.bf16.mxu0 0
    %191 = vmatpush2.bf16.msra.mxu0 0
    %192 = vmatprep.subr.bf16.mxu0 0
    %193 = vmatpush2.bf16.msra.mxu0 0
    %194 = vmatprep.subr.bf16.mxu0 0
    %195 = vmatpush2.bf16.msra.mxu0 0
    %196 = vmatprep.subr.bf16.mxu0 0
    %197 = vmatpush2.bf16.msra.mxu0 0
    %198 = vmatprep.mubr.bf16.mxu0 0
    %199 = vmatmul.mubr.bf16.gmra.mxu0 %v143
    %v200 = vpop.f32.mrf.mxu0
    %v201 = vadd.f32 0.0, %v200
    %v202 = vpop.f32.mrf.mxu0
    %v203 = vpop.f32.mrf.mxu0
    %v204 = vadd.f32 0.0, %v203
    %v205 = vpop.f32.mrf.mxu0
    %206 = vmatprep.mubr.bf16.mxu0 0
    %207 = vmatmul.mubr.bf16.gmra.mxu0 %v146
    %v208 = vpop.f32.mrf.mxu0
    %v209 = vadd.f32 0.0, %v208
    %v210 = vpop.f32.mrf.mxu0
    %v211 = vpop.f32.mrf.mxu0
    %v212 = vadd.f32 0.0, %v211
    %v213 = vpop.f32.mrf.mxu0
    %214 = vmatprep.mubr.bf16.mxu0 0
    %215 = vmatmul.mubr.bf16.gmra.mxu0 %v149
    %v216 = vpop.f32.mrf.mxu0
    %v217 = vadd.f32 0.0, %v216
    %v218 = vpop.f32.mrf.mxu0
    %v219 = vpop.f32.mrf.mxu0
    %v220 = vadd.f32 0.0, %v219
    %v221 = vpop.f32.mrf.mxu0
    %222 = vmatprep.mubr.bf16.mxu0 0
    %223 = vmatmul.mubr.bf16.gmra.mxu0 %v152
    %v224 = vpop.f32.mrf.mxu0
    %v225 = vadd.f32 0.0, %v224
    %v226 = vpop.f32.mrf.mxu0
    %v227 = vpop.f32.mrf.mxu0
    %v228 = vadd.f32 0.0, %v227
    %v229 = vpop.f32.mrf.mxu0
    %230 = vmatprep.mubr.bf16.mxu0 0
    %231 = vmatmul.mubr.bf16.gmra.mxu0 %v155
    %v232 = vpop.f32.mrf.mxu0
    %v233 = vadd.f32 0.0, %v232
    %v234 = vpop.f32.mrf.mxu0
    %v235 = vpop.f32.mrf.mxu0
    %v236 = vadd.f32 0.0, %v235
    %v237 = vpop.f32.mrf.mxu0
    %238 = vmatprep.mubr.bf16.mxu0 0
    %239 = vmatmul.mubr.bf16.gmra.mxu0 %v158
    %v240 = vpop.f32.mrf.mxu0
    %v241 = vadd.f32 0.0, %v240
    %v242 = vpop.f32.mrf.mxu0
    %v243 = vpop.f32.mrf.mxu0
    %v244 = vadd.f32 0.0, %v243
    %v245 = vpop.f32.mrf.mxu0
    %246 = vmatprep.mubr.bf16.mxu0 0
    %247 = vmatmul.mubr.bf16.gmra.mxu0 %v161
    %v248 = vpop.f32.mrf.mxu0
    %v249 = vadd.f32 0.0, %v248
    %v250 = vpop.f32.mrf.mxu0
    %v251 = vpop.f32.mrf.mxu0
    %v252 = vadd.f32 0.0, %v251
    %v253 = vpop.f32.mrf.mxu0
    %254 = vmatprep.mubr.bf16.mxu0 0
    %255 = vmatmul.mubr.bf16.gmra.mxu0 %v164
    %v256 = vpop.f32.mrf.mxu0
    %v257 = vadd.f32 0.0, %v256
    %v258 = vpop.f32.mrf.mxu0
    %v259 = vpop.f32.mrf.mxu0
    %v260 = vadd.f32 0.0, %v259
    %v261 = vpop.f32.mrf.mxu0
    %262 = vdwg.mxu0
    %v263 = vpack.c.bf16 %v204, %v201
    %v264 = vpack.c.bf16 %v212, %v209
    %v265 = vpack.c.bf16 %v220, %v217
    %v266 = vpack.c.bf16 %v228, %v225
    %v267 = vpack.c.bf16 %v236, %v233
    %v268 = vpack.c.bf16 %v244, %v241
    %v269 = vpack.c.bf16 %v252, %v249
    %v270 = vpack.c.bf16 %v260, %v257
    %v271 = vld [vmem:[#allocation2] sm:$0xf]
    %v272 = vld [vmem:[#allocation2 + $0x4] sm:$0xf]
    %v273 = vld [vmem:[#allocation2 + $0x8] sm:$0xf]
    %v274 = vld [vmem:[#allocation2 + $0xc] sm:$0xf]
    %v275 = vld [vmem:[#allocation2 + $0x10] sm:$0xf]
    %v276 = vld [vmem:[#allocation2 + $0x14] sm:$0xf]
    %v277 = vld [vmem:[#allocation2 + $0x18] sm:$0xf]
    %v278 = vld [vmem:[#allocation2 + $0x1c] sm:$0xf]
    %v279 = vld [vmem:[#allocation2 + $0x20] sm:$0xf]
    %v280 = vld [vmem:[#allocation2 + $0x24] sm:$0xf]
    %v281 = vld [vmem:[#allocation2 + $0x28] sm:$0xf]
    %v282 = vld [vmem:[#allocation2 + $0x2c] sm:$0xf]
    %v283 = vld [vmem:[#allocation2 + $0x30] sm:$0xf]
    %v284 = vld [vmem:[#allocation2 + $0x34] sm:$0xf]
    %v285 = vld [vmem:[#allocation2 + $0x38] sm:$0xf]
    %v286 = vld [vmem:[#allocation2 + $0x3c] sm:$0xf]
    %v287 = vld [vmem:[#allocation2 + $0x40] sm:$0xf]
    %v288 = vld [vmem:[#allocation2 + $0x44] sm:$0xf]
    %v289 = vld [vmem:[#allocation2 + $0x48] sm:$0xf]
    %v290 = vld [vmem:[#allocation2 + $0x4c] sm:$0xf]
    %v291 = vld [vmem:[#allocation2 + $0x50] sm:$0xf]
    %v292 = vld [vmem:[#allocation2 + $0x54] sm:$0xf]
    %v293 = vld [vmem:[#allocation2 + $0x58] sm:$0xf]
    %v294 = vld [vmem:[#allocation2 + $0x5c] sm:$0xf]
    %v295 = vld [vmem:[#allocation2 + $0x60] sm:$0xf]
    %v296 = vld [vmem:[#allocation2 + $0x64] sm:$0xf]
    %v297 = vld [vmem:[#allocation2 + $0x68] sm:$0xf]
    %v298 = vld [vmem:[#allocation2 + $0x6c] sm:$0xf]
    %v299 = vld [vmem:[#allocation2 + $0x70] sm:$0xf]
    %v300 = vld [vmem:[#allocation2 + $0x74] sm:$0xf]
    %v301 = vld [vmem:[#allocation2 + $0x78] sm:$0xf]
    %v302 = vld [vmem:[#allocation2 + $0x7c] sm:$0xf]
    %v303 = vld [vmem:[#allocation2 + $0x80] sm:$0xf]
    %v304 = vld [vmem:[#allocation2 + $0x84] sm:$0xf]
    %v305 = vld [vmem:[#allocation2 + $0x88] sm:$0xf]
    %v306 = vld [vmem:[#allocation2 + $0x8c] sm:$0xf]
    %v307 = vld [vmem:[#allocation2 + $0x90] sm:$0xf]
    %v308 = vld [vmem:[#allocation2 + $0x94] sm:$0xf]
    %v309 = vld [vmem:[#allocation2 + $0x98] sm:$0xf]
    %v310 = vld [vmem:[#allocation2 + $0x9c] sm:$0xf]
    %v311 = vld [vmem:[#allocation2 + $0xa0] sm:$0xf]
    %v312 = vld [vmem:[#allocation2 + $0xa4] sm:$0xf]
    %v313 = vld [vmem:[#allocation2 + $0xa8] sm:$0xf]
    %v314 = vld [vmem:[#allocation2 + $0xac] sm:$0xf]
    %v315 = vld [vmem:[#allocation2 + $0xb0] sm:$0xf]
    %v316 = vld [vmem:[#allocation2 + $0xb4] sm:$0xf]
    %v317 = vld [vmem:[#allocation2 + $0xb8] sm:$0xf]
    %v318 = vld [vmem:[#allocation2 + $0xbc] sm:$0xf]
    %v319 = vld [vmem:[#allocation2 + $0xc0] sm:$0xf]
    %v320 = vld [vmem:[#allocation2 + $0xc4] sm:$0xf]
    %v321 = vld [vmem:[#allocation2 + $0xc8] sm:$0xf]
    %v322 = vld [vmem:[#allocation2 + $0xcc] sm:$0xf]
    %v323 = vld [vmem:[#allocation2 + $0xd0] sm:$0xf]
    %v324 = vld [vmem:[#allocation2 + $0xd4] sm:$0xf]
    %v325 = vld [vmem:[#allocation2 + $0xd8] sm:$0xf]
    %v326 = vld [vmem:[#allocation2 + $0xdc] sm:$0xf]
    %v327 = vld [vmem:[#allocation2 + $0xe0] sm:$0xf]
    %v328 = vld [vmem:[#allocation2 + $0xe4] sm:$0xf]
    %v329 = vld [vmem:[#allocation2 + $0xe8] sm:$0xf]
    %v330 = vld [vmem:[#allocation2 + $0xec] sm:$0xf]
    %v331 = vld [vmem:[#allocation2 + $0xf0] sm:$0xf]
    %v332 = vld [vmem:[#allocation2 + $0xf4] sm:$0xf]
    %v333 = vld [vmem:[#allocation2 + $0xf8] sm:$0xf]
    %v334 = vld [vmem:[#allocation2 + $0xfc] sm:$0xf]
    %v335 = vld [vmem:[#allocation2 + $0x100] sm:$0xf]
    %v336 = vld [vmem:[#allocation2 + $0x104] sm:$0xf]
    %v337 = vld [vmem:[#allocation2 + $0x108] sm:$0xf]
    %v338 = vld [vmem:[#allocation2 + $0x10c] sm:$0xf]
    %v339 = vld [vmem:[#allocation2 + $0x110] sm:$0xf]
    %v340 = vld [vmem:[#allocation2 + $0x114] sm:$0xf]
    %v341 = vld [vmem:[#allocation2 + $0x118] sm:$0xf]
    %v342 = vld [vmem:[#allocation2 + $0x11c] sm:$0xf]
    %v343 = vld [vmem:[#allocation2 + $0x120] sm:$0xf]
    %v344 = vld [vmem:[#allocation2 + $0x124] sm:$0xf]
    %v345 = vld [vmem:[#allocation2 + $0x128] sm:$0xf]
    %v346 = vld [vmem:[#allocation2 + $0x12c] sm:$0xf]
    %v347 = vld [vmem:[#allocation2 + $0x130] sm:$0xf]
    %v348 = vld [vmem:[#allocation2 + $0x134] sm:$0xf]
    %v349 = vld [vmem:[#allocation2 + $0x138] sm:$0xf]
    %v350 = vld [vmem:[#allocation2 + $0x13c] sm:$0xf]
    %v351 = vld [vmem:[%s3] sm:$0x1]
    %v353 = vlaneseq
    %v354 = vshrl.u32 %v353, 7
    %v355 = vsub.s32 0, %v354
    %v356 = vrot.slane %v351, %v355
    %v438 = vunpack.c.l.b16 %v271
    %v439 = vunpack.c.l.b16 %v272
    %v440 = vunpack.c.l.b16 %v273
    %v441 = vunpack.c.l.b16 %v274
    %v442 = vunpack.c.l.b16 %v275
    %v443 = vunpack.c.l.b16 %v276
    %v444 = vunpack.c.l.b16 %v277
    %v445 = vunpack.c.l.b16 %v278
    %v446 = vunpack.c.l.b16 %v279
    %v447 = vunpack.c.l.b16 %v280
    %v448 = vunpack.c.l.b16 %v281
    %v449 = vunpack.c.l.b16 %v282
    %v450 = vunpack.c.l.b16 %v283
    %v451 = vunpack.c.l.b16 %v284
    %v452 = vunpack.c.l.b16 %v285
    %v453 = vunpack.c.l.b16 %v286
    %v454 = vunpack.c.l.b16 %v287
    %v455 = vunpack.c.l.b16 %v288
    %v456 = vunpack.c.l.b16 %v289
    %v457 = vunpack.c.l.b16 %v290
    %v458 = vunpack.c.l.b16 %v291
    %v459 = vunpack.c.l.b16 %v292
    %v460 = vunpack.c.l.b16 %v293
    %v461 = vunpack.c.l.b16 %v294
    %v462 = vunpack.c.l.b16 %v295
    %v463 = vunpack.c.l.b16 %v296
    %v464 = vunpack.c.l.b16 %v297
    %v465 = vunpack.c.l.b16 %v298
    %v466 = vunpack.c.l.b16 %v299
    %v467 = vunpack.c.l.b16 %v300
    %v468 = vunpack.c.l.b16 %v301
    %v469 = vunpack.c.l.b16 %v302
    %v470 = vunpack.c.l.b16 %v303
    %v471 = vunpack.c.l.b16 %v304
    %v472 = vunpack.c.l.b16 %v305
    %v473 = vunpack.c.l.b16 %v306
    %v474 = vunpack.c.l.b16 %v307
    %v475 = vunpack.c.l.b16 %v308
    %v476 = vunpack.c.l.b16 %v309
    %v477 = vunpack.c.l.b16 %v310
    %v478 = vunpack.c.l.b16 %v311
    %v479 = vunpack.c.l.b16 %v312
    %v480 = vunpack.c.l.b16 %v313
    %v481 = vunpack.c.l.b16 %v314
    %v482 = vunpack.c.l.b16 %v315
    %v483 = vunpack.c.l.b16 %v316
    %v484 = vunpack.c.l.b16 %v317
    %v485 = vunpack.c.l.b16 %v318
    %v486 = vunpack.c.l.b16 %v319
    %v487 = vunpack.c.l.b16 %v320
    %v488 = vunpack.c.l.b16 %v321
    %v489 = vunpack.c.l.b16 %v322
    %v490 = vunpack.c.l.b16 %v323
    %v491 = vunpack.c.l.b16 %v324
    %v492 = vunpack.c.l.b16 %v325
    %v493 = vunpack.c.l.b16 %v326
    %v494 = vunpack.c.l.b16 %v327
    %v495 = vunpack.c.l.b16 %v328
    %v496 = vunpack.c.l.b16 %v329
    %v497 = vunpack.c.l.b16 %v330
    %v498 = vunpack.c.l.b16 %v331
    %v499 = vunpack.c.l.b16 %v332
    %v500 = vunpack.c.l.b16 %v333
    %v501 = vunpack.c.l.b16 %v334
    %v502 = vunpack.c.l.b16 %v335
    %v503 = vunpack.c.l.b16 %v336
    %v504 = vunpack.c.l.b16 %v337
    %v505 = vunpack.c.l.b16 %v338
    %v506 = vunpack.c.l.b16 %v339
    %v507 = vunpack.c.l.b16 %v340
    %v508 = vunpack.c.l.b16 %v341
    %v509 = vunpack.c.l.b16 %v342
    %v510 = vunpack.c.l.b16 %v343
    %v511 = vunpack.c.l.b16 %v344
    %v512 = vunpack.c.l.b16 %v345
    %v513 = vunpack.c.l.b16 %v346
    %v514 = vunpack.c.l.b16 %v347
    %v515 = vunpack.c.l.b16 %v348
    %v516 = vunpack.c.l.b16 %v349
    %v517 = vunpack.c.l.b16 %v350
    %v518 = vpack.c.b16 %v439, %v438
    %v519 = vpack.c.b16 %v441, %v440
    %v520 = vpack.c.b16 %v443, %v442
    %v521 = vpack.c.b16 %v445, %v444
    %v522 = vpack.c.b16 %v447, %v446
    %v523 = vpack.c.b16 %v449, %v448
    %v524 = vpack.c.b16 %v451, %v450
    %v525 = vpack.c.b16 %v453, %v452
    %v526 = vpack.c.b16 %v455, %v454
    %v527 = vpack.c.b16 %v457, %v456
    %v528 = vpack.c.b16 %v459, %v458
    %v529 = vpack.c.b16 %v461, %v460
    %v530 = vpack.c.b16 %v463, %v462
    %v531 = vpack.c.b16 %v465, %v464
    %v532 = vpack.c.b16 %v467, %v466
    %v533 = vpack.c.b16 %v469, %v468
    %v534 = vpack.c.b16 %v471, %v470
    %v535 = vpack.c.b16 %v473, %v472
    %v536 = vpack.c.b16 %v475, %v474
    %v537 = vpack.c.b16 %v477, %v476
    %v538 = vpack.c.b16 %v479, %v478
    %v539 = vpack.c.b16 %v481, %v480
    %v540 = vpack.c.b16 %v483, %v482
    %v541 = vpack.c.b16 %v485, %v484
    %v542 = vpack.c.b16 %v487, %v486
    %v543 = vpack.c.b16 %v489, %v488
    %v544 = vpack.c.b16 %v491, %v490
    %v545 = vpack.c.b16 %v493, %v492
    %v546 = vpack.c.b16 %v495, %v494
    %v547 = vpack.c.b16 %v497, %v496
    %v548 = vpack.c.b16 %v499, %v498
    %v549 = vpack.c.b16 %v501, %v500
    %v550 = vpack.c.b16 %v503, %v502
    %v551 = vpack.c.b16 %v505, %v504
    %v552 = vpack.c.b16 %v507, %v506
    %v553 = vpack.c.b16 %v509, %v508
    %v554 = vpack.c.b16 %v511, %v510
    %v555 = vpack.c.b16 %v513, %v512
    %v556 = vpack.c.b16 %v515, %v514
    %v557 = vpack.c.b16 %v517, %v516
    %598 = vmatprep.subr.bf16.mxu0 0
    %599 = vmatpush1.bf16.msra.mxu0 %v525
    %600 = vmatprep.subr.bf16.mxu0 0
    %601 = vmatpush1.bf16.msra.mxu0 %v524
    %602 = vmatprep.subr.bf16.mxu0 0
    %603 = vmatpush1.bf16.msra.mxu0 %v523
    %604 = vmatprep.subr.bf16.mxu0 0
    %605 = vmatpush1.bf16.msra.mxu0 %v522
    %606 = vmatprep.subr.bf16.mxu0 0
    %607 = vmatpush1.bf16.msra.mxu0 %v521
    %608 = vmatprep.subr.bf16.mxu0 0
    %609 = vmatpush1.bf16.msra.mxu0 %v520
    %610 = vmatprep.subr.bf16.mxu0 0
    %611 = vmatpush1.bf16.msra.mxu0 %v519
    %612 = vmatprep.subr.bf16.mxu0 0
    %613 = vmatpush1.bf16.msra.mxu0 %v518
    %614 = vmatprep.subr.bf16.mxu0 0
    %615 = vmatpush2.bf16.msra.mxu0 %v533
    %616 = vmatprep.subr.bf16.mxu0 0
    %617 = vmatpush2.bf16.msra.mxu0 %v532
    %618 = vmatprep.subr.bf16.mxu0 0
    %619 = vmatpush2.bf16.msra.mxu0 %v531
    %620 = vmatprep.subr.bf16.mxu0 0
    %621 = vmatpush2.bf16.msra.mxu0 %v530
    %622 = vmatprep.subr.bf16.mxu0 0
    %623 = vmatpush2.bf16.msra.mxu0 %v529
    %624 = vmatprep.subr.bf16.mxu0 0
    %625 = vmatpush2.bf16.msra.mxu0 %v528
    %626 = vmatprep.subr.bf16.mxu0 0
    %627 = vmatpush2.bf16.msra.mxu0 %v527
    %628 = vmatprep.subr.bf16.mxu0 0
    %629 = vmatpush2.bf16.msra.mxu0 %v526
    %630 = vmatprep.mubr.bf16.mxu0 %v263
    %631 = vmatmul.mubr.bf16.gmra.mxu0 %v137
    %v632 = vpop.f32.mrf.mxu0
    %v633 = vadd.f32 %v356, %v632
    %v634 = vpop.f32.mrf.mxu0
    %v635 = vpop.f32.mrf.mxu0
    %v636 = vadd.f32 %v356, %v635
    %v637 = vpop.f32.mrf.mxu0
    %638 = vmatprep.mubr.bf16.mxu0 %v264
    %639 = vmatmul.mubr.bf16.gmra.mxu0 %v138
    %v640 = vpop.f32.mrf.mxu0
    %v641 = vadd.f32 %v356, %v640
    %v642 = vpop.f32.mrf.mxu0
    %v643 = vpop.f32.mrf.mxu0
    %v644 = vadd.f32 %v356, %v643
    %v645 = vpop.f32.mrf.mxu0
    %646 = vdwg.mxu0
    %647 = vmatprep.subr.bf16.mxu0 0
    %648 = vmatpush1.bf16.msra.mxu0 %v541
    %649 = vmatprep.subr.bf16.mxu0 0
    %650 = vmatpush1.bf16.msra.mxu0 %v540
    %651 = vmatprep.subr.bf16.mxu0 0
    %652 = vmatpush1.bf16.msra.mxu0 %v539
    %653 = vmatprep.subr.bf16.mxu0 0
    %654 = vmatpush1.bf16.msra.mxu0 %v538
    %655 = vmatprep.subr.bf16.mxu0 0
    %656 = vmatpush1.bf16.msra.mxu0 %v537
    %657 = vmatprep.subr.bf16.mxu0 0
    %658 = vmatpush1.bf16.msra.mxu0 %v536
    %659 = vmatprep.subr.bf16.mxu0 0
    %660 = vmatpush1.bf16.msra.mxu0 %v535
    %661 = vmatprep.subr.bf16.mxu0 0
    %662 = vmatpush1.bf16.msra.mxu0 %v534
    %663 = vmatprep.subr.bf16.mxu0 0
    %664 = vmatpush2.bf16.msra.mxu0 %v549
    %665 = vmatprep.subr.bf16.mxu0 0
    %666 = vmatpush2.bf16.msra.mxu0 %v548
    %667 = vmatprep.subr.bf16.mxu0 0
    %668 = vmatpush2.bf16.msra.mxu0 %v547
    %669 = vmatprep.subr.bf16.mxu0 0
    %670 = vmatpush2.bf16.msra.mxu0 %v546
    %671 = vmatprep.subr.bf16.mxu0 0
    %672 = vmatpush2.bf16.msra.mxu0 %v545
    %673 = vmatprep.subr.bf16.mxu0 0
    %674 = vmatpush2.bf16.msra.mxu0 %v544
    %675 = vmatprep.subr.bf16.mxu0 0
    %676 = vmatpush2.bf16.msra.mxu0 %v543
    %677 = vmatprep.subr.bf16.mxu0 0
    %678 = vmatpush2.bf16.msra.mxu0 %v542
    %679 = vmatprep.mubr.bf16.mxu0 %v267
    %680 = vmatmul.mubr.bf16.gmra.mxu0 %v265
    %v681 = vpop.f32.mrf.mxu0
    %v682 = vadd.f32 %v633, %v681
    %v683 = vpop.f32.mrf.mxu0
    %v684 = vpop.f32.mrf.mxu0
    %v685 = vadd.f32 %v636, %v684
    %v686 = vpop.f32.mrf.mxu0
    %687 = vmatprep.mubr.bf16.mxu0 %v268
    %688 = vmatmul.mubr.bf16.gmra.mxu0 %v266
    %v689 = vpop.f32.mrf.mxu0
    %v690 = vadd.f32 %v641, %v689
    %v691 = vpop.f32.mrf.mxu0
    %v692 = vpop.f32.mrf.mxu0
    %v693 = vadd.f32 %v644, %v692
    %v694 = vpop.f32.mrf.mxu0
    %695 = vdwg.mxu0
    %696 = vmatprep.subr.bf16.mxu0 0
    %697 = vmatpush1.bf16.msra.mxu0 %v557
    %698 = vmatprep.subr.bf16.mxu0 0
    %699 = vmatpush1.bf16.msra.mxu0 %v556
    %700 = vmatprep.subr.bf16.mxu0 0
    %701 = vmatpush1.bf16.msra.mxu0 %v555
    %702 = vmatprep.subr.bf16.mxu0 0
    %703 = vmatpush1.bf16.msra.mxu0 %v554
    %704 = vmatprep.subr.bf16.mxu0 0
    %705 = vmatpush1.bf16.msra.mxu0 %v553
    %706 = vmatprep.subr.bf16.mxu0 0
    %707 = vmatpush1.bf16.msra.mxu0 %v552
    %708 = vmatprep.subr.bf16.mxu0 0
    %709 = vmatpush1.bf16.msra.mxu0 %v551
    %710 = vmatprep.subr.bf16.mxu0 0
    %711 = vmatpush1.bf16.msra.mxu0 %v550
    %712 = vmatprep.subr.bf16.mxu0 0
    %713 = vmatpush2.bf16.msra.mxu0 0
    %714 = vmatprep.subr.bf16.mxu0 0
    %715 = vmatpush2.bf16.msra.mxu0 0
    %716 = vmatprep.subr.bf16.mxu0 0
    %717 = vmatpush2.bf16.msra.mxu0 0
    %718 = vmatprep.subr.bf16.mxu0 0
    %719 = vmatpush2.bf16.msra.mxu0 0
    %720 = vmatprep.subr.bf16.mxu0 0
    %721 = vmatpush2.bf16.msra.mxu0 0
    %722 = vmatprep.subr.bf16.mxu0 0
    %723 = vmatpush2.bf16.msra.mxu0 0
    %724 = vmatprep.subr.bf16.mxu0 0
    %725 = vmatpush2.bf16.msra.mxu0 0
    %726 = vmatprep.subr.bf16.mxu0 0
    %727 = vmatpush2.bf16.msra.mxu0 0
    %728 = vmatprep.mubr.bf16.mxu0 0
    %729 = vmatmul.mubr.bf16.gmra.mxu0 %v269
    %v730 = vpop.f32.mrf.mxu0
    %v731 = vadd.f32 %v682, %v730
    %v732 = vpop.f32.mrf.mxu0
    %v733 = vpop.f32.mrf.mxu0
    %v734 = vadd.f32 %v685, %v733
    %v735 = vpop.f32.mrf.mxu0
    %736 = vmatprep.mubr.bf16.mxu0 0
    %737 = vmatmul.mubr.bf16.gmra.mxu0 %v270
    %v738 = vpop.f32.mrf.mxu0
    %v739 = vadd.f32 %v690, %v738
    %v740 = vpop.f32.mrf.mxu0
    %v741 = vpop.f32.mrf.mxu0
    %v742 = vadd.f32 %v693, %v741
    %v743 = vpop.f32.mrf.mxu0
    %744 = vdwg.mxu0
    %746 = vset.pattern.permute.xlu0 0
    %747 = vperm.xlu0 %746, %v85
    %v748 = vpop.permute.xlu0 %747
    %751 = vset.pattern.permute.xlu0 0
    %752 = vperm.xlu0 %751, %v86
    %v753 = vpop.permute.xlu0 %752
    %756 = vset.pattern.permute.xlu0 0
    %757 = vperm.xlu0 %756, %v87
    %v758 = vpop.permute.xlu0 %757
    %761 = vset.pattern.permute.xlu0 0
    %762 = vperm.xlu0 %761, %v88
    %v763 = vpop.permute.xlu0 %762
    %v765 = vmul.f32 %v731, %v748
    %v766 = vmul.f32 %v734, %v753
    %v767 = vmul.f32 %v739, %v758
    %v768 = vmul.f32 %v742, %v763
    %v769 = vadd.f32 %v765, %v766
    %v770 = vadd.f32 %v769, %v767
    %v771 = vadd.f32 %v770, %v768
    %v772 = vrot.slane %v771, 4
    %v773 = vadd.f32 %v771, %v772
    %v774 = vrot.slane %v773, 2
    %v775 = vadd.f32 %v773, %v774
    %v776 = vrot.slane %v775, 1
    %v777 = vadd.f32 %v775, %v776
    %v778 = vmul.f32 %v777, 0.03125
    %v779 = vsub.f32 %v731, %v778
    %v780 = vsub.f32 %v734, %v778
    %v781 = vsub.f32 %v739, %v778
    %v782 = vsub.f32 %v742, %v778
    %v783 = vmul.f32 %v779, %v748
    %v784 = vmul.f32 %v780, %v753
    %v785 = vmul.f32 %v781, %v758
    %v786 = vmul.f32 %v782, %v763
    %v787 = vmul.f32 %v783, %v783
    %v788 = vmul.f32 %v784, %v784
    %v789 = vmul.f32 %v785, %v785
    %v790 = vmul.f32 %v786, %v786
    %v791 = vadd.f32 %v787, %v788
    %v792 = vadd.f32 %v791, %v789
    %v793 = vadd.f32 %v792, %v790
    %v794 = vrot.slane %v793, 4
    %v795 = vadd.f32 %v793, %v794
    %v796 = vrot.slane %v795, 2
    %v797 = vadd.f32 %v795, %v796
    %v798 = vrot.slane %v797, 1
    %v799 = vadd.f32 %v797, %v798
    %v800 = vmul.f32 %v799, 0.03125
    %v801 = vadd.f32 %v800, 1e-05
    %v802 = vrsqrt.pop %v801
    %v803 = vmul.f32 %v783, %v802
    %v804 = vmul.f32 %v784, %v802
    %v805 = vmul.f32 %v785, %v802
    %v806 = vmul.f32 %v786, %v802
    %v807 = vld [vmem:[%s4] sm:$0x1]
    %v809 = vlaneseq
    %v810 = vshrl.u32 %v809, 7
    %v811 = vsub.s32 0, %v810
    %v812 = vrot.slane %v807, %v811
    %v814 = vmul.f32 %v803, %v812
    %v815 = vmul.f32 %v804, %v812
    %v816 = vmul.f32 %v805, %v812
    %v817 = vmul.f32 %v806, %v812
    %v818 = vld [vmem:[%s5] sm:$0x1]
    %v820 = vlaneseq
    %v821 = vshrl.u32 %v820, 7
    %v822 = vsub.s32 0, %v821
    %v823 = vrot.slane %v818, %v822
    %v825 = vadd.f32 %v814, %v823
    %v826 = vadd.f32 %v815, %v823
    %v827 = vadd.f32 %v816, %v823
    %v828 = vadd.f32 %v817, %v823
    %v829 = vmax.f32 %v825, 0.0
    %v830 = vmax.f32 %v826, 0.0
    %v831 = vmax.f32 %v827, 0.0
    %v832 = vmax.f32 %v828, 0.0
    %v833 = vpack.c.bf16 %v830, %v829
    %v834 = vpack.c.bf16 %v832, %v831
    %835 = vmatprep.subr.bf16.mxu0 0
    %836 = vmatpush1.bf16.msra.mxu0 0
    %837 = vmatprep.subr.bf16.mxu0 0
    %838 = vmatpush1.bf16.msra.mxu0 0
    %839 = vmatprep.subr.bf16.mxu0 0
    %840 = vmatpush1.bf16.msra.mxu0 0
    %841 = vmatprep.subr.bf16.mxu0 0
    %842 = vmatpush1.bf16.msra.mxu0 0
    %843 = vmatprep.subr.bf16.mxu0 0
    %844 = vmatpush1.bf16.msra.mxu0 0
    %845 = vmatprep.subr.bf16.mxu0 0
    %846 = vmatpush1.bf16.msra.mxu0 0
    %847 = vmatprep.subr.bf16.mxu0 0
    %848 = vmatpush1.bf16.msra.mxu0 %v834
    %849 = vmatprep.subr.bf16.mxu0 0
    %850 = vmatpush1.bf16.msra.mxu0 %v833
    %851 = vmatprep.subr.bf16.mxu0 0
    %852 = vmatpush2.bf16.msra.mxu0 0
    %853 = vmatprep.subr.bf16.mxu0 0
    %854 = vmatpush2.bf16.msra.mxu0 0
    %855 = vmatprep.subr.bf16.mxu0 0
    %856 = vmatpush2.bf16.msra.mxu0 0
    %857 = vmatprep.subr.bf16.mxu0 0
    %858 = vmatpush2.bf16.msra.mxu0 0
    %859 = vmatprep.subr.bf16.mxu0 0
    %860 = vmatpush2.bf16.msra.mxu0 0
    %861 = vmatprep.subr.bf16.mxu0 0
    %862 = vmatpush2.bf16.msra.mxu0 0
    %863 = vmatprep.subr.bf16.mxu0 0
    %864 = vmatpush2.bf16.msra.mxu0 0
    %865 = vmatprep.subr.bf16.mxu0 0
    %866 = vmatpush2.bf16.msra.mxu0 0
    %867 = vmatprep.mubr.bf16.mxu0 0
    %868 = vmatmul.mubr.bf16.gmra.mxu0 %v143
    %v869 = vpop.f32.mrf.mxu0
    %v870 = vadd.f32 0.0, %v869
    %v871 = vpop.f32.mrf.mxu0
    %v872 = vpop.f32.mrf.mxu0
    %v873 = vadd.f32 0.0, %v872
    %v874 = vpop.f32.mrf.mxu0
    %875 = vmatprep.mubr.bf16.mxu0 0
    %876 = vmatmul.mubr.bf16.gmra.mxu0 %v146
    %v877 = vpop.f32.mrf.mxu0
    %v878 = vadd.f32 0.0, %v877
    %v879 = vpop.f32.mrf.mxu0
    %v880 = vpop.f32.mrf.mxu0
    %v881 = vadd.f32 0.0, %v880
    %v882 = vpop.f32.mrf.mxu0
    %883 = vmatprep.mubr.bf16.mxu0 0
    %884 = vmatmul.mubr.bf16.gmra.mxu0 %v149
    %v885 = vpop.f32.mrf.mxu0
    %v886 = vadd.f32 0.0, %v885
    %v887 = vpop.f32.mrf.mxu0
    %v888 = vpop.f32.mrf.mxu0
    %v889 = vadd.f32 0.0, %v888
    %v890 = vpop.f32.mrf.mxu0
    %891 = vmatprep.mubr.bf16.mxu0 0
    %892 = vmatmul.mubr.bf16.gmra.mxu0 %v152
    %v893 = vpop.f32.mrf.mxu0
    %v894 = vadd.f32 0.0, %v893
    %v895 = vpop.f32.mrf.mxu0
    %v896 = vpop.f32.mrf.mxu0
    %v897 = vadd.f32 0.0, %v896
    %v898 = vpop.f32.mrf.mxu0
    %899 = vmatprep.mubr.bf16.mxu0 0
    %900 = vmatmul.mubr.bf16.gmra.mxu0 %v155
    %v901 = vpop.f32.mrf.mxu0
    %v902 = vadd.f32 0.0, %v901
    %v903 = vpop.f32.mrf.mxu0
    %v904 = vpop.f32.mrf.mxu0
    %v905 = vadd.f32 0.0, %v904
    %v906 = vpop.f32.mrf.mxu0
    %907 = vmatprep.mubr.bf16.mxu0 0
    %908 = vmatmul.mubr.bf16.gmra.mxu0 %v158
    %v909 = vpop.f32.mrf.mxu0
    %v910 = vadd.f32 0.0, %v909
    %v911 = vpop.f32.mrf.mxu0
    %v912 = vpop.f32.mrf.mxu0
    %v913 = vadd.f32 0.0, %v912
    %v914 = vpop.f32.mrf.mxu0
    %915 = vmatprep.mubr.bf16.mxu0 0
    %916 = vmatmul.mubr.bf16.gmra.mxu0 %v161
    %v917 = vpop.f32.mrf.mxu0
    %v918 = vadd.f32 0.0, %v917
    %v919 = vpop.f32.mrf.mxu0
    %v920 = vpop.f32.mrf.mxu0
    %v921 = vadd.f32 0.0, %v920
    %v922 = vpop.f32.mrf.mxu0
    %923 = vmatprep.mubr.bf16.mxu0 0
    %924 = vmatmul.mubr.bf16.gmra.mxu0 %v164
    %v925 = vpop.f32.mrf.mxu0
    %v926 = vadd.f32 0.0, %v925
    %v927 = vpop.f32.mrf.mxu0
    %v928 = vpop.f32.mrf.mxu0
    %v929 = vadd.f32 0.0, %v928
    %v930 = vpop.f32.mrf.mxu0
    %931 = vdwg.mxu0
    %v932 = vpack.c.bf16 %v873, %v870
    %v933 = vpack.c.bf16 %v881, %v878
    %v934 = vpack.c.bf16 %v889, %v886
    %v935 = vpack.c.bf16 %v897, %v894
    %v936 = vpack.c.bf16 %v905, %v902
    %v937 = vpack.c.bf16 %v913, %v910
    %v938 = vpack.c.bf16 %v921, %v918
    %v939 = vpack.c.bf16 %v929, %v926
    %v940 = vld [vmem:[#allocation5] sm:$0xf]
    %v941 = vld [vmem:[#allocation5 + $0x4] sm:$0xf]
    %v942 = vld [vmem:[#allocation5 + $0x8] sm:$0xf]
    %v943 = vld [vmem:[#allocation5 + $0xc] sm:$0xf]
    %v944 = vld [vmem:[#allocation5 + $0x10] sm:$0xf]
    %v945 = vld [vmem:[#allocation5 + $0x14] sm:$0xf]
    %v946 = vld [vmem:[#allocation5 + $0x18] sm:$0xf]
    %v947 = vld [vmem:[#allocation5 + $0x1c] sm:$0xf]
    %v948 = vld [vmem:[#allocation5 + $0x20] sm:$0xf]
    %v949 = vld [vmem:[#allocation5 + $0x24] sm:$0xf]
    %v950 = vld [vmem:[#allocation5 + $0x28] sm:$0xf]
    %v951 = vld [vmem:[#allocation5 + $0x2c] sm:$0xf]
    %v952 = vld [vmem:[#allocation5 + $0x30] sm:$0xf]
    %v953 = vld [vmem:[#allocation5 + $0x34] sm:$0xf]
    %v954 = vld [vmem:[#allocation5 + $0x38] sm:$0xf]
    %v955 = vld [vmem:[#allocation5 + $0x3c] sm:$0xf]
    %v956 = vld [vmem:[#allocation5 + $0x40] sm:$0xf]
    %v957 = vld [vmem:[#allocation5 + $0x44] sm:$0xf]
    %v958 = vld [vmem:[#allocation5 + $0x48] sm:$0xf]
    %v959 = vld [vmem:[#allocation5 + $0x4c] sm:$0xf]
    %v960 = vld [vmem:[#allocation5 + $0x50] sm:$0xf]
    %v961 = vld [vmem:[#allocation5 + $0x54] sm:$0xf]
    %v962 = vld [vmem:[#allocation5 + $0x58] sm:$0xf]
    %v963 = vld [vmem:[#allocation5 + $0x5c] sm:$0xf]
    %v964 = vld [vmem:[#allocation5 + $0x60] sm:$0xf]
    %v965 = vld [vmem:[#allocation5 + $0x64] sm:$0xf]
    %v966 = vld [vmem:[#allocation5 + $0x68] sm:$0xf]
    %v967 = vld [vmem:[#allocation5 + $0x6c] sm:$0xf]
    %v968 = vld [vmem:[#allocation5 + $0x70] sm:$0xf]
    %v969 = vld [vmem:[#allocation5 + $0x74] sm:$0xf]
    %v970 = vld [vmem:[#allocation5 + $0x78] sm:$0xf]
    %v971 = vld [vmem:[#allocation5 + $0x7c] sm:$0xf]
    %v972 = vld [vmem:[#allocation5 + $0x80] sm:$0xf]
    %v973 = vld [vmem:[#allocation5 + $0x84] sm:$0xf]
    %v974 = vld [vmem:[#allocation5 + $0x88] sm:$0xf]
    %v975 = vld [vmem:[#allocation5 + $0x8c] sm:$0xf]
    %v976 = vld [vmem:[#allocation5 + $0x90] sm:$0xf]
    %v977 = vld [vmem:[#allocation5 + $0x94] sm:$0xf]
    %v978 = vld [vmem:[#allocation5 + $0x98] sm:$0xf]
    %v979 = vld [vmem:[#allocation5 + $0x9c] sm:$0xf]
    %v980 = vld [vmem:[#allocation5 + $0xa0] sm:$0xf]
    %v981 = vld [vmem:[#allocation5 + $0xa4] sm:$0xf]
    %v982 = vld [vmem:[#allocation5 + $0xa8] sm:$0xf]
    %v983 = vld [vmem:[#allocation5 + $0xac] sm:$0xf]
    %v984 = vld [vmem:[#allocation5 + $0xb0] sm:$0xf]
    %v985 = vld [vmem:[#allocation5 + $0xb4] sm:$0xf]
    %v986 = vld [vmem:[#allocation5 + $0xb8] sm:$0xf]
    %v987 = vld [vmem:[#allocation5 + $0xbc] sm:$0xf]
    %v988 = vld [vmem:[#allocation5 + $0xc0] sm:$0xf]
    %v989 = vld [vmem:[#allocation5 + $0xc4] sm:$0xf]
    %v990 = vld [vmem:[#allocation5 + $0xc8] sm:$0xf]
    %v991 = vld [vmem:[#allocation5 + $0xcc] sm:$0xf]
    %v992 = vld [vmem:[#allocation5 + $0xd0] sm:$0xf]
    %v993 = vld [vmem:[#allocation5 + $0xd4] sm:$0xf]
    %v994 = vld [vmem:[#allocation5 + $0xd8] sm:$0xf]
    %v995 = vld [vmem:[#allocation5 + $0xdc] sm:$0xf]
    %v996 = vld [vmem:[#allocation5 + $0xe0] sm:$0xf]
    %v997 = vld [vmem:[#allocation5 + $0xe4] sm:$0xf]
    %v998 = vld [vmem:[#allocation5 + $0xe8] sm:$0xf]
    %v999 = vld [vmem:[#allocation5 + $0xec] sm:$0xf]
    %v1000 = vld [vmem:[#allocation5 + $0xf0] sm:$0xf]
    %v1001 = vld [vmem:[#allocation5 + $0xf4] sm:$0xf]
    %v1002 = vld [vmem:[#allocation5 + $0xf8] sm:$0xf]
    %v1003 = vld [vmem:[#allocation5 + $0xfc] sm:$0xf]
    %v1004 = vld [vmem:[#allocation5 + $0x100] sm:$0xf]
    %v1005 = vld [vmem:[#allocation5 + $0x104] sm:$0xf]
    %v1006 = vld [vmem:[#allocation5 + $0x108] sm:$0xf]
    %v1007 = vld [vmem:[#allocation5 + $0x10c] sm:$0xf]
    %v1008 = vld [vmem:[#allocation5 + $0x110] sm:$0xf]
    %v1009 = vld [vmem:[#allocation5 + $0x114] sm:$0xf]
    %v1010 = vld [vmem:[#allocation5 + $0x118] sm:$0xf]
    %v1011 = vld [vmem:[#allocation5 + $0x11c] sm:$0xf]
    %v1012 = vld [vmem:[#allocation5 + $0x120] sm:$0xf]
    %v1013 = vld [vmem:[#allocation5 + $0x124] sm:$0xf]
    %v1014 = vld [vmem:[#allocation5 + $0x128] sm:$0xf]
    %v1015 = vld [vmem:[#allocation5 + $0x12c] sm:$0xf]
    %v1016 = vld [vmem:[#allocation5 + $0x130] sm:$0xf]
    %v1017 = vld [vmem:[#allocation5 + $0x134] sm:$0xf]
    %v1018 = vld [vmem:[#allocation5 + $0x138] sm:$0xf]
    %v1019 = vld [vmem:[#allocation5 + $0x13c] sm:$0xf]
    %v1020 = vld [vmem:[%s7] sm:$0x1]
    %v1022 = vlaneseq
    %v1023 = vshrl.u32 %v1022, 7
    %v1024 = vsub.s32 0, %v1023
    %v1025 = vrot.slane %v1020, %v1024
    %v1107 = vunpack.c.l.b16 %v940
    %v1108 = vunpack.c.l.b16 %v941
    %v1109 = vunpack.c.l.b16 %v942
    %v1110 = vunpack.c.l.b16 %v943
    %v1111 = vunpack.c.l.b16 %v944
    %v1112 = vunpack.c.l.b16 %v945
    %v1113 = vunpack.c.l.b16 %v946
    %v1114 = vunpack.c.l.b16 %v947
    %v1115 = vunpack.c.l.b16 %v948
    %v1116 = vunpack.c.l.b16 %v949
    %v1117 = vunpack.c.l.b16 %v950
    %v1118 = vunpack.c.l.b16 %v951
    %v1119 = vunpack.c.l.b16 %v952
    %v1120 = vunpack.c.l.b16 %v953
    %v1121 = vunpack.c.l.b16 %v954
    %v1122 = vunpack.c.l.b16 %v955
    %v1123 = vunpack.c.l.b16 %v956
    %v1124 = vunpack.c.l.b16 %v957
    %v1125 = vunpack.c.l.b16 %v958
    %v1126 = vunpack.c.l.b16 %v959
    %v1127 = vunpack.c.l.b16 %v960
    %v1128 = vunpack.c.l.b16 %v961
    %v1129 = vunpack.c.l.b16 %v962
    %v1130 = vunpack.c.l.b16 %v963
    %v1131 = vunpack.c.l.b16 %v964
    %v1132 = vunpack.c.l.b16 %v965
    %v1133 = vunpack.c.l.b16 %v966
    %v1134 = vunpack.c.l.b16 %v967
    %v1135 = vunpack.c.l.b16 %v968
    %v1136 = vunpack.c.l.b16 %v969
    %v1137 = vunpack.c.l.b16 %v970
    %v1138 = vunpack.c.l.b16 %v971
    %v1139 = vunpack.c.l.b16 %v972
    %v1140 = vunpack.c.l.b16 %v973
    %v1141 = vunpack.c.l.b16 %v974
    %v1142 = vunpack.c.l.b16 %v975
    %v1143 = vunpack.c.l.b16 %v976
    %v1144 = vunpack.c.l.b16 %v977
    %v1145 = vunpack.c.l.b16 %v978
    %v1146 = vunpack.c.l.b16 %v979
    %v1147 = vunpack.c.l.b16 %v980
    %v1148 = vunpack.c.l.b16 %v981
    %v1149 = vunpack.c.l.b16 %v982
    %v1150 = vunpack.c.l.b16 %v983
    %v1151 = vunpack.c.l.b16 %v984
    %v1152 = vunpack.c.l.b16 %v985
    %v1153 = vunpack.c.l.b16 %v986
    %v1154 = vunpack.c.l.b16 %v987
    %v1155 = vunpack.c.l.b16 %v988
    %v1156 = vunpack.c.l.b16 %v989
    %v1157 = vunpack.c.l.b16 %v990
    %v1158 = vunpack.c.l.b16 %v991
    %v1159 = vunpack.c.l.b16 %v992
    %v1160 = vunpack.c.l.b16 %v993
    %v1161 = vunpack.c.l.b16 %v994
    %v1162 = vunpack.c.l.b16 %v995
    %v1163 = vunpack.c.l.b16 %v996
    %v1164 = vunpack.c.l.b16 %v997
    %v1165 = vunpack.c.l.b16 %v998
    %v1166 = vunpack.c.l.b16 %v999
    %v1167 = vunpack.c.l.b16 %v1000
    %v1168 = vunpack.c.l.b16 %v1001
    %v1169 = vunpack.c.l.b16 %v1002
    %v1170 = vunpack.c.l.b16 %v1003
    %v1171 = vunpack.c.l.b16 %v1004
    %v1172 = vunpack.c.l.b16 %v1005
    %v1173 = vunpack.c.l.b16 %v1006
    %v1174 = vunpack.c.l.b16 %v1007
    %v1175 = vunpack.c.l.b16 %v1008
    %v1176 = vunpack.c.l.b16 %v1009
    %v1177 = vunpack.c.l.b16 %v1010
    %v1178 = vunpack.c.l.b16 %v1011
    %v1179 = vunpack.c.l.b16 %v1012
    %v1180 = vunpack.c.l.b16 %v1013
    %v1181 = vunpack.c.l.b16 %v1014
    %v1182 = vunpack.c.l.b16 %v1015
    %v1183 = vunpack.c.l.b16 %v1016
    %v1184 = vunpack.c.l.b16 %v1017
    %v1185 = vunpack.c.l.b16 %v1018
    %v1186 = vunpack.c.l.b16 %v1019
    %v1187 = vpack.c.b16 %v1108, %v1107
    %v1188 = vpack.c.b16 %v1110, %v1109
    %v1189 = vpack.c.b16 %v1112, %v1111
    %v1190 = vpack.c.b16 %v1114, %v1113
    %v1191 = vpack.c.b16 %v1116, %v1115
    %v1192 = vpack.c.b16 %v1118, %v1117
    %v1193 = vpack.c.b16 %v1120, %v1119
    %v1194 = vpack.c.b16 %v1122, %v1121
    %v1195 = vpack.c.b16 %v1124, %v1123
    %v1196 = vpack.c.b16 %v1126, %v1125
    %v1197 = vpack.c.b16 %v1128, %v1127
    %v1198 = vpack.c.b16 %v1130, %v1129
    %v1199 = vpack.c.b16 %v1132, %v1131
    %v1200 = vpack.c.b16 %v1134, %v1133
    %v1201 = vpack.c.b16 %v1136, %v1135
    %v1202 = vpack.c.b16 %v1138, %v1137
    %v1203 = vpack.c.b16 %v1140, %v1139
    %v1204 = vpack.c.b16 %v1142, %v1141
    %v1205 = vpack.c.b16 %v1144, %v1143
    %v1206 = vpack.c.b16 %v1146, %v1145
    %v1207 = vpack.c.b16 %v1148, %v1147
    %v1208 = vpack.c.b16 %v1150, %v1149
    %v1209 = vpack.c.b16 %v1152, %v1151
    %v1210 = vpack.c.b16 %v1154, %v1153
    %v1211 = vpack.c.b16 %v1156, %v1155
    %v1212 = vpack.c.b16 %v1158, %v1157
    %v1213 = vpack.c.b16 %v1160, %v1159
    %v1214 = vpack.c.b16 %v1162, %v1161
    %v1215 = vpack.c.b16 %v1164, %v1163
    %v1216 = vpack.c.b16 %v1166, %v1165
    %v1217 = vpack.c.b16 %v1168, %v1167
    %v1218 = vpack.c.b16 %v1170, %v1169
    %v1219 = vpack.c.b16 %v1172, %v1171
    %v1220 = vpack.c.b16 %v1174, %v1173
    %v1221 = vpack.c.b16 %v1176, %v1175
    %v1222 = vpack.c.b16 %v1178, %v1177
    %v1223 = vpack.c.b16 %v1180, %v1179
    %v1224 = vpack.c.b16 %v1182, %v1181
    %v1225 = vpack.c.b16 %v1184, %v1183
    %v1226 = vpack.c.b16 %v1186, %v1185
    %1267 = vmatprep.subr.bf16.mxu0 0
    %1268 = vmatpush1.bf16.msra.mxu0 %v1194
    %1269 = vmatprep.subr.bf16.mxu0 0
    %1270 = vmatpush1.bf16.msra.mxu0 %v1193
    %1271 = vmatprep.subr.bf16.mxu0 0
    %1272 = vmatpush1.bf16.msra.mxu0 %v1192
    %1273 = vmatprep.subr.bf16.mxu0 0
    %1274 = vmatpush1.bf16.msra.mxu0 %v1191
    %1275 = vmatprep.subr.bf16.mxu0 0
    %1276 = vmatpush1.bf16.msra.mxu0 %v1190
    %1277 = vmatprep.subr.bf16.mxu0 0
    %1278 = vmatpush1.bf16.msra.mxu0 %v1189
    %1279 = vmatprep.subr.bf16.mxu0 0
    %1280 = vmatpush1.bf16.msra.mxu0 %v1188
    %1281 = vmatprep.subr.bf16.mxu0 0
    %1282 = vmatpush1.bf16.msra.mxu0 %v1187
    %1283 = vmatprep.subr.bf16.mxu0 0
    %1284 = vmatpush2.bf16.msra.mxu0 %v1202
    %1285 = vmatprep.subr.bf16.mxu0 0
    %1286 = vmatpush2.bf16.msra.mxu0 %v1201
    %1287 = vmatprep.subr.bf16.mxu0 0
    %1288 = vmatpush2.bf16.msra.mxu0 %v1200
    %1289 = vmatprep.subr.bf16.mxu0 0
    %1290 = vmatpush2.bf16.msra.mxu0 %v1199
    %1291 = vmatprep.subr.bf16.mxu0 0
    %1292 = vmatpush2.bf16.msra.mxu0 %v1198
    %1293 = vmatprep.subr.bf16.mxu0 0
    %1294 = vmatpush2.bf16.msra.mxu0 %v1197
    %1295 = vmatprep.subr.bf16.mxu0 0
    %1296 = vmatpush2.bf16.msra.mxu0 %v1196
    %1297 = vmatprep.subr.bf16.mxu0 0
    %1298 = vmatpush2.bf16.msra.mxu0 %v1195
    %1299 = vmatprep.mubr.bf16.mxu0 %v932
    %1300 = vmatmul.mubr.bf16.gmra.mxu0 %v833
    %v1301 = vpop.f32.mrf.mxu0
    %v1302 = vadd.f32 %v1025, %v1301
    %v1303 = vpop.f32.mrf.mxu0
    %v1304 = vpop.f32.mrf.mxu0
    %v1305 = vadd.f32 %v1025, %v1304
    %v1306 = vpop.f32.mrf.mxu0
    %1307 = vmatprep.mubr.bf16.mxu0 %v933
    %1308 = vmatmul.mubr.bf16.gmra.mxu0 %v834
    %v1309 = vpop.f32.mrf.mxu0
    %v1310 = vadd.f32 %v1025, %v1309
    %v1311 = vpop.f32.mrf.mxu0
    %v1312 = vpop.f32.mrf.mxu0
    %v1313 = vadd.f32 %v1025, %v1312
    %v1314 = vpop.f32.mrf.mxu0
    %1315 = vdwg.mxu0
    %1316 = vmatprep.subr.bf16.mxu0 0
    %1317 = vmatpush1.bf16.msra.mxu0 %v1210
    %1318 = vmatprep.subr.bf16.mxu0 0
    %1319 = vmatpush1.bf16.msra.mxu0 %v1209
    %1320 = vmatprep.subr.bf16.mxu0 0
    %1321 = vmatpush1.bf16.msra.mxu0 %v1208
    %1322 = vmatprep.subr.bf16.mxu0 0
    %1323 = vmatpush1.bf16.msra.mxu0 %v1207
    %1324 = vmatprep.subr.bf16.mxu0 0
    %1325 = vmatpush1.bf16.msra.mxu0 %v1206
    %1326 = vmatprep.subr.bf16.mxu0 0
    %1327 = vmatpush1.bf16.msra.mxu0 %v1205
    %1328 = vmatprep.subr.bf16.mxu0 0
    %1329 = vmatpush1.bf16.msra.mxu0 %v1204
    %1330 = vmatprep.subr.bf16.mxu0 0
    %1331 = vmatpush1.bf16.msra.mxu0 %v1203
    %1332 = vmatprep.subr.bf16.mxu0 0
    %1333 = vmatpush2.bf16.msra.mxu0 %v1218
    %1334 = vmatprep.subr.bf16.mxu0 0
    %1335 = vmatpush2.bf16.msra.mxu0 %v1217
    %1336 = vmatprep.subr.bf16.mxu0 0
    %1337 = vmatpush2.bf16.msra.mxu0 %v1216
    %1338 = vmatprep.subr.bf16.mxu0 0
    %1339 = vmatpush2.bf16.msra.mxu0 %v1215
    %1340 = vmatprep.subr.bf16.mxu0 0
    %1341 = vmatpush2.bf16.msra.mxu0 %v1214
    %1342 = vmatprep.subr.bf16.mxu0 0
    %1343 = vmatpush2.bf16.msra.mxu0 %v1213
    %1344 = vmatprep.subr.bf16.mxu0 0
    %1345 = vmatpush2.bf16.msra.mxu0 %v1212
    %1346 = vmatprep.subr.bf16.mxu0 0
    %1347 = vmatpush2.bf16.msra.mxu0 %v1211
    %1348 = vmatprep.mubr.bf16.mxu0 %v936
    %1349 = vmatmul.mubr.bf16.gmra.mxu0 %v934
    %v1350 = vpop.f32.mrf.mxu0
    %v1351 = vadd.f32 %v1302, %v1350
    %v1352 = vpop.f32.mrf.mxu0
    %v1353 = vpop.f32.mrf.mxu0
    %v1354 = vadd.f32 %v1305, %v1353
    %v1355 = vpop.f32.mrf.mxu0
    %1356 = vmatprep.mubr.bf16.mxu0 %v937
    %1357 = vmatmul.mubr.bf16.gmra.mxu0 %v935
    %v1358 = vpop.f32.mrf.mxu0
    %v1359 = vadd.f32 %v1310, %v1358
    %v1360 = vpop.f32.mrf.mxu0
    %v1361 = vpop.f32.mrf.mxu0
    %v1362 = vadd.f32 %v1313, %v1361
    %v1363 = vpop.f32.mrf.mxu0
    %1364 = vdwg.mxu0
    %1365 = vmatprep.subr.bf16.mxu0 0
    %1366 = vmatpush1.bf16.msra.mxu0 %v1226
    %1367 = vmatprep.subr.bf16.mxu0 0
    %1368 = vmatpush1.bf16.msra.mxu0 %v1225
    %1369 = vmatprep.subr.bf16.mxu0 0
    %1370 = vmatpush1.bf16.msra.mxu0 %v1224
    %1371 = vmatprep.subr.bf16.mxu0 0
    %1372 = vmatpush1.bf16.msra.mxu0 %v1223
    %1373 = vmatprep.subr.bf16.mxu0 0
    %1374 = vmatpush1.bf16.msra.mxu0 %v1222
    %1375 = vmatprep.subr.bf16.mxu0 0
    %1376 = vmatpush1.bf16.msra.mxu0 %v1221
    %1377 = vmatprep.subr.bf16.mxu0 0
    %1378 = vmatpush1.bf16.msra.mxu0 %v1220
    %1379 = vmatprep.subr.bf16.mxu0 0
    %1380 = vmatpush1.bf16.msra.mxu0 %v1219
    %1381 = vmatprep.subr.bf16.mxu0 0
    %1382 = vmatpush2.bf16.msra.mxu0 0
    %1383 = vmatprep.subr.bf16.mxu0 0
    %1384 = vmatpush2.bf16.msra.mxu0 0
    %1385 = vmatprep.subr.bf16.mxu0 0
    %1386 = vmatpush2.bf16.msra.mxu0 0
    %1387 = vmatprep.subr.bf16.mxu0 0
    %1388 = vmatpush2.bf16.msra.mxu0 0
    %1389 = vmatprep.subr.bf16.mxu0 0
    %1390 = vmatpush2.bf16.msra.mxu0 0
    %1391 = vmatprep.subr.bf16.mxu0 0
    %1392 = vmatpush2.bf16.msra.mxu0 0
    %1393 = vmatprep.subr.bf16.mxu0 0
    %1394 = vmatpush2.bf16.msra.mxu0 0
    %1395 = vmatprep.subr.bf16.mxu0 0
    %1396 = vmatpush2.bf16.msra.mxu0 0
    %1397 = vmatprep.mubr.bf16.mxu0 0
    %1398 = vmatmul.mubr.bf16.gmra.mxu0 %v938
    %v1399 = vpop.f32.mrf.mxu0
    %v1400 = vadd.f32 %v1351, %v1399
    %v1401 = vpop.f32.mrf.mxu0
    %v1402 = vpop.f32.mrf.mxu0
    %v1403 = vadd.f32 %v1354, %v1402
    %v1404 = vpop.f32.mrf.mxu0
    %1405 = vmatprep.mubr.bf16.mxu0 0
    %1406 = vmatmul.mubr.bf16.gmra.mxu0 %v939
    %v1407 = vpop.f32.mrf.mxu0
    %v1408 = vadd.f32 %v1359, %v1407
    %v1409 = vpop.f32.mrf.mxu0
    %v1410 = vpop.f32.mrf.mxu0
    %v1411 = vadd.f32 %v1362, %v1410
    %v1412 = vpop.f32.mrf.mxu0
    %1413 = vdwg.mxu0
    %v1414 = vld [vmem:[%s8] sm:$0x1]
    %v1415 = vpack.c.bf16 %v1403, %v1400
    %v1416 = vpack.c.bf16 %v1411, %v1408
    %v1418 = vsel %vm141, %v1414, 0
    %1420 = vmatprep.subr.bf16.mxu0 0
    %1421 = vmatpush1.bf16.msra.mxu0 0
    %1422 = vmatprep.subr.bf16.mxu0 0
    %1423 = vmatpush1.bf16.msra.mxu0 0
    %1424 = vmatprep.subr.bf16.mxu0 0
    %1425 = vmatpush1.bf16.msra.mxu0 0
    %1426 = vmatprep.subr.bf16.mxu0 0
    %1427 = vmatpush1.bf16.msra.mxu0 0
    %1428 = vmatprep.subr.bf16.mxu0 0
    %1429 = vmatpush1.bf16.msra.mxu0 0
    %1430 = vmatprep.subr.bf16.mxu0 0
    %1431 = vmatpush1.bf16.msra.mxu0 0
    %1432 = vmatprep.subr.bf16.mxu0 0
    %1433 = vmatpush1.bf16.msra.mxu0 %v1416
    %1434 = vmatprep.subr.bf16.mxu0 0
    %1435 = vmatpush1.bf16.msra.mxu0 %v1415
    %1436 = vmatprep.subr.bf16.mxu0 0
    %1437 = vmatpush2.bf16.msra.mxu0 0
    %1438 = vmatprep.subr.bf16.mxu0 0
    %1439 = vmatpush2.bf16.msra.mxu0 0
    %1440 = vmatprep.subr.bf16.mxu0 0
    %1441 = vmatpush2.bf16.msra.mxu0 0
    %1442 = vmatprep.subr.bf16.mxu0 0
    %1443 = vmatpush2.bf16.msra.mxu0 0
    %1444 = vmatprep.subr.bf16.mxu0 0
    %1445 = vmatpush2.bf16.msra.mxu0 0
    %1446 = vmatprep.subr.bf16.mxu0 0
    %1447 = vmatpush2.bf16.msra.mxu0 0
    %1448 = vmatprep.subr.bf16.mxu0 0
    %1449 = vmatpush2.bf16.msra.mxu0 0
    %1450 = vmatprep.subr.bf16.mxu0 0
    %1451 = vmatpush2.bf16.msra.mxu0 0
    %1452 = vmatprep.mubr.bf16.mxu0 0
    %1453 = vmatmul.mubr.bf16.gmra.mxu0 %v1418
    %v1454 = vpop.f32.mrf.mxu0
    %v1455 = vadd.f32 0.0, %v1454
    %v1456 = vpop.f32.mrf.mxu0
    %v1457 = vpop.f32.mrf.mxu0
    %v1458 = vpop.f32.mrf.mxu0
    %1459 = vdwg.mxu0
    %1460 = vst [vmem:[#allocation7] sm:$0x3] %v1455
    // Predicated region
    $region50: #{tpu_custom_call.1} parent=1 // pred_check
      _
    $region51: #{tpu_custom_call.1} parent=1 // pred_check_branch
      %1462 = sbr.rel (0) target = $region53
    $region52: #{tpu_custom_call.1} parent=1 // pred_region
      %s1464 = ssub.s32 32, 32
      %1465 = vsyncadd [#allocation4], %s1464
      %s1467 = sshll.u32 [#allocation7], 4
      %s1468 = int_to_ptr.vmem [resolvable:$true] %s1467
      %1470 = dma.vmem_to_hbm [thread:$0]  %s1468, 32, %s10, [#allocation4]
    $region53: #{tpu_custom_call.1} parent=1 // pred_fallthru
      _
    // Predicated region
    $region54: #{tpu_custom_call.1} parent=1 // pred_check
      _
    $region55: #{tpu_custom_call.1} parent=1 // pred_check_branch
      %1472 = sbr.rel (0) target = $region57
    $region56: #{tpu_custom_call.1} parent=1 // pred_region
      %1473 = dma.done [#allocation4], 32
    $region57: #{tpu_custom_call.1} parent=1 // pred_fallthru
      _
    %1474 = vsyncpa [#allocation3], 1
    %1475 = vsyncpa [#allocation6], 1
    %1476 = vsyncpa [#allocation4], 1

</llo_original>
